<compile_context>
chip_gen: v7x
topology: tpu7x:2x2x1
jax: 0.10.0
libtpu: 0.0.40
codegen_flags: <defaults>
</compile_context>

<pallas_src>
import functools

import jax
import jax.numpy as jnp
from jax.experimental import pallas as pl
from jax.experimental.pallas import tpu as pltpu


# -----------------------------------------------------------------------------
# Kernel 1: fused tanh-RNN over time.
#   grid=(L,) marked "arbitrary"; hidden state lives in VMEM scratch; W_hh,
#   bias and h0 use constant index_maps so they are fetched once and stay
#   resident; x_proj / outputs stream one time-step block per grid step.
# -----------------------------------------------------------------------------
def _rnn_kernel(xproj_ref, h0_ref, whh_ref, bhh_ref, out_ref, hfin_ref, h_sc):
    t = pl.program_id(0)

    @pl.when(t == 0)
    def _():
        h_sc[...] = h0_ref[...]

    h_prev = h_sc[...]                                        # (B, H) f32
    h_new = jnp.tanh(
        xproj_ref[0]                                          # (B, H) f32
        + jnp.dot(h_prev.astype(jnp.bfloat16), whh_ref[...],  # bf16 MXU, f32 acc
                  preferred_element_type=jnp.float32)
        + bhh_ref[...])
    h_sc[...] = h_new
    out_ref[0] = h_new

    @pl.when(t == pl.num_programs(0) - 1)
    def _():
        hfin_ref[...] = h_new


def pallas_rnn(x_proj, h0, w_hh_bf16, b_hh_1h):
    """x_proj: [L,B,H] f32, h0: [B,H] f32, w_hh: [H,H] bf16, b_hh: [1,H] f32.
    Returns (outputs [L,B,H] f32, h_final [B,H] f32)."""
    L, B, H = x_proj.shape
    grid_spec = pltpu.PrefetchScalarGridSpec(
        num_scalar_prefetch=0,
        grid=(L,),
        in_specs=[
            pl.BlockSpec((1, B, H), lambda t: (t, 0, 0)),   # streamed per step
            pl.BlockSpec((B, H), lambda t: (0, 0)),         # resident
            pl.BlockSpec((H, H), lambda t: (0, 0)),         # resident (bf16)
            pl.BlockSpec((1, H), lambda t: (0, 0)),         # resident
        ],
        out_specs=(
            pl.BlockSpec((1, B, H), lambda t: (t, 0, 0)),
            pl.BlockSpec((B, H), lambda t: (0, 0)),         # written at last step
        ),
        scratch_shapes=[pltpu.VMEM((B, H), jnp.float32)],
    )
    outs, h_final = pl.pallas_call(
        _rnn_kernel,
        out_shape=(jax.ShapeDtypeStruct((L, B, H), jnp.float32),
                   jax.ShapeDtypeStruct((B, H), jnp.float32)),
        grid_spec=grid_spec,
        compiler_params=pltpu.CompilerParams(
            dimension_semantics=("arbitrary",)),            # true recurrence
    )(x_proj, h0, w_hh_bf16, b_hh_1h)
    return outs, h_final


# -----------------------------------------------------------------------------
# Kernel 2: fused global "general" attention, single invocation.
#   All matmuls are batched bf16 einsums (f32 accumulation); masked softmax
#   stays in f32; reciprocal goes to the (otherwise idle) EUP slot.
# -----------------------------------------------------------------------------
def _attention_kernel(h_ref, mem_ref, mask_ref, wa_ref, wc_ref, wh_ref,
                      out_ref, attn_ref):
    B, T, H = h_ref.shape
    _, S, _ = mem_ref.shape

    h = h_ref[...]                                   # (B, T, H) f32
    mem = mem_ref[...]                               # (B, S, H) f32
    h_bf = h.astype(jnp.bfloat16)
    mem_bf = mem.astype(jnp.bfloat16)

    wa = jnp.broadcast_to(wa_ref[...], (B, H, H))    # bf16, leading broadcast
    wc = jnp.broadcast_to(wc_ref[...], (B, H, H))
    wh = jnp.broadcast_to(wh_ref[...], (B, H, H))

    # score(h, m) = (h @ W_a) . m   ("general" attention)
    hq = jnp.einsum('bth,bhk->btk', h_bf, wa,
                    preferred_element_type=jnp.float32)              # (B,T,H)
    scores = jnp.einsum('btk,bsk->bts', hq.astype(jnp.bfloat16), mem_bf,
                        preferred_element_type=jnp.float32)          # (B,T,S)
    scores = jnp.where(mask_ref[...] > 0.0, scores, -1e9)

    # length-masked softmax in f32
    m = jnp.max(scores, axis=-1, keepdims=True)
    e = jnp.exp(scores - m)
    denom = jnp.maximum(jnp.sum(e, axis=-1, keepdims=True), 1e-30)   # 0-len guard
    attn = e * pl.reciprocal(denom, approx=True)                     # EUP path

    # context and output: out = tanh(ctx @ W_c + h @ W_h)
    ctx = jnp.einsum('bts,bsh->bth', attn.astype(jnp.bfloat16), mem_bf,
                     preferred_element_type=jnp.float32)             # (B,T,H)
    out = jnp.tanh(
        jnp.einsum('bth,bhk->btk', ctx.astype(jnp.bfloat16), wc,
                   preferred_element_type=jnp.float32)
        + jnp.einsum('bth,bhk->btk', h_bf, wh,
                     preferred_element_type=jnp.float32))

    out_ref[...] = out
    attn_ref[...] = attn


def pallas_global_attention(h_btH, mem_bsH, mask_b1s, w_a, w_c, w_h):
    """Single-invocation fused attention; everything resident in VMEM."""
    B, T, H = h_btH.shape
    _, S, _ = mem_bsH.shape
    return pl.pallas_call(
        _attention_kernel,
        out_shape=(jax.ShapeDtypeStruct((B, T, H), jnp.float32),
                   jax.ShapeDtypeStruct((B, T, S), jnp.float32)),
        compiler_params=pltpu.CompilerParams(
            vmem_limit_bytes=64 * 1024 * 1024),
    )(h_btH, mem_bsH, mask_b1s, w_a, w_c, w_h)


# -----------------------------------------------------------------------------
# Model glue — mirrors PointerGenerator.forward semantics.
# -----------------------------------------------------------------------------
def pointer_generator_forward(params, src, lengths, tgt, dec_state=None):
    """src: [src_len, batch] int32, tgt: [tgt_len, batch] int32, lengths: [batch].
    Returns (decoder_outputs [T-1,B,H], attns dict of [T-1,B,S], dec_state)."""
    # ----- tgt = tgt[:-1] -----
    tgt = tgt[:-1]

    S, B = src.shape
    T, _ = tgt.shape
    H = params["w_hh_enc"].shape[0]

    # cast matmul weights once to bf16 (f32 accumulation inside the kernels)
    w_hh_enc = params["w_hh_enc"].astype(jnp.bfloat16)
    w_hh_dec = params["w_hh_dec"].astype(jnp.bfloat16)
    w_attn = params["w_attn"].astype(jnp.bfloat16)
    w_out_ctx = params["w_out_ctx"].astype(jnp.bfloat16)
    w_out_h = params["w_out_h"].astype(jnp.bfloat16)

    # ----- encoder: embedding + merged input projection (XLA), fused RNN -----
    x = params["src_emb"][src]                                  # [S, B, E]
    x_proj = (jnp.dot(x.reshape(S * B, -1), params["w_ih_enc"])
              + params["b_ih_enc"]).reshape(S, B, H)
    h0 = jnp.zeros((B, H), jnp.float32)
    memory_bank, enc_final = pallas_rnn(x_proj, h0, w_hh_enc,
                                        params["b_hh_enc"][None, :])

    # ----- init decoder state from encoder final state -----
    dec_h = enc_final if dec_state is None else dec_state[0][0]

    # ----- decoder RNN -----
    y = params["tgt_emb"][tgt]                                  # [T, B, E]
    y_proj = (jnp.dot(y.reshape(T * B, -1), params["w_ih_dec"])
              + params["b_ih_dec"]).reshape(T, B, H)
    rnn_out, dec_final = pallas_rnn(y_proj, dec_h, w_hh_dec,
                                    params["b_hh_dec"][None, :])

    # ----- fused global attention (single invocation, batched bf16 einsums) ---
    # TODO(synk): at production shapes, express the batch-major re-layout and
    # T-tiling via BlockSpec index_maps (and emit attn in bf16) instead of the
    # XLA transposes below.
    h_btH = jnp.transpose(rnn_out, (1, 0, 2))                   # [B, T, H]
    mem_bsH = jnp.transpose(memory_bank, (1, 0, 2))             # [B, S, H]
    pos = jnp.arange(S, dtype=jnp.int32)[None, :]
    mask = (pos < lengths[:, None]).astype(jnp.float32)[:, None, :]  # [B,1,S]

    out_bth, attn_bts = pallas_global_attention(
        h_btH, mem_bsH, mask, w_attn, w_out_ctx, w_out_h)

    decoder_outputs = jnp.transpose(out_bth, (1, 0, 2))         # [T, B, H]
    attn = jnp.transpose(attn_bts, (1, 0, 2))                   # [T, B, S]

    attns = {"std": attn, "copy": attn}     # copy attention shares the std dist
    dec_state_out = (dec_final[None, :, :],)                    # [1, B, H]
    return decoder_outputs, attns, dec_state_out


# -----------------------------------------------------------------------------
# Deterministic parameter init
# -----------------------------------------------------------------------------
def init_params(key, src_vocab, tgt_vocab, emb, hidden):
    ks = jax.random.split(key, 12)
    n = lambda k, shp: (jax.random.normal(k, shp, jnp.float32) * 0.1)
    return {
        "src_emb": n(ks[0], (src_vocab, emb)),
        "tgt_emb": n(ks[1], (tgt_vocab, emb)),
        "w_ih_enc": n(ks[2], (emb, hidden)),
        "b_ih_enc": n(ks[3], (hidden,)),
        "w_hh_enc": n(ks[4], (hidden, hidden)),
        "b_hh_enc": n(ks[5], (hidden,)),
        "w_ih_dec": n(ks[6], (emb, hidden)),
        "b_ih_dec": n(ks[7], (hidden,)),
        "w_hh_dec": n(ks[8], (hidden, hidden)),
        "b_hh_dec": n(ks[9], (hidden,)),
        "w_attn": n(ks[10], (hidden, hidden)),
        # W_out over [ctx; h] split into its two halves (avoids in-kernel concat)
        "w_out_ctx": n(ks[11], (hidden, hidden)),
        "w_out_h": n(jax.random.fold_in(ks[11], 1), (hidden, hidden)),
    }


if __name__ == "__main__":
    key = jax.random.PRNGKey(0)
    SRC_VOCAB, TGT_VOCAB = 50, 60
    # H=128 -> lane-dense H-last-dim outputs and 128-aligned K/N for the MXU.
    EMB, HIDDEN = 32, 128
    SRC_LEN, TGT_LEN, BATCH = 16, 8, 2

    params = init_params(key, SRC_VOCAB, TGT_VOCAB, EMB, HIDDEN)

    k1, k2 = jax.random.split(jax.random.fold_in(key, 123))
    src = jax.random.randint(k1, (SRC_LEN, BATCH), 0, SRC_VOCAB, jnp.int32)
    tgt = jax.random.randint(k2, (TGT_LEN, BATCH), 0, TGT_VOCAB, jnp.int32)
    lengths = jnp.array([SRC_LEN, 9], jnp.int32)

    fwd = jax.jit(functools.partial(pointer_generator_forward, params))
    dec_out, attns, dec_state = fwd(src, lengths, tgt)
    jax.block_until_ready((dec_out, attns, dec_state))

    assert dec_out.shape == (TGT_LEN - 1, BATCH, HIDDEN)
    assert attns["std"].shape == (TGT_LEN - 1, BATCH, SRC_LEN)
    assert dec_state[0].shape == (1, BATCH, HIDDEN)
    assert bool(jnp.all(jnp.isfinite(dec_out)))
    # attention rows ~ sum to 1 (approximate EUP reciprocal in the softmax)
    assert jnp.allclose(attns["std"].sum(-1), 1.0, atol=1e-2)
    # masked (padded) source positions get numerically-zero attention
    assert float(attns["std"][:, 1, int(lengths[1]):].max()) < 1e-6

    print("KERNEL_OK")
</pallas_src>

<mosaic_0001>
module attributes {stable_mosaic.version = 11 : i64} {
  func.func @_rnn_kernel(%arg0: i32, %arg1: memref<1x2x128xf32, #tpu.memory_space<vmem>>, %arg2: memref<2x128xf32, #tpu.memory_space<vmem>>, %arg3: memref<128x128xbf16, #tpu.memory_space<vmem>>, %arg4: memref<1x128xf32, #tpu.memory_space<vmem>>, %arg5: memref<1x2x128xf32, #tpu.memory_space<vmem>>, %arg6: memref<2x128xf32, #tpu.memory_space<vmem>>, %arg7: memref<2x128xf32, #tpu.memory_space<vmem>>) attributes {dimension_semantics = [#tpu.dimension_semantics<arbitrary>], iteration_bounds = array<i64: 16>, scalar_prefetch = 0 : i64, scratch_operands = 1 : i64, tpu.core_type = #tpu.core_type<tc>, window_params = [{transform_indices = @transform_0, window_bounds = array<i64: 1, 2, 128>}, {pipeline_mode = #tpu.pipeline_mode<synchronous>, transform_indices = @transform_1, window_bounds = array<i64: 2, 128>}, {pipeline_mode = #tpu.pipeline_mode<synchronous>, transform_indices = @transform_2, window_bounds = array<i64: 128, 128>}, {pipeline_mode = #tpu.pipeline_mode<synchronous>, transform_indices = @transform_3, window_bounds = array<i64: 1, 128>}, {transform_indices = @transform_4, window_bounds = array<i64: 1, 2, 128>}, {pipeline_mode = #tpu.pipeline_mode<synchronous>, transform_indices = @transform_5, window_bounds = array<i64: 2, 128>}]} {
    %c0_i32 = arith.constant 0 : i32
    %0 = arith.cmpi eq, %arg0, %c0_i32 : i32
    %1 = arith.extui %0 : i1 to i32
    %c0_i32_0 = arith.constant 0 : i32
    %2 = arith.cmpi ne, %1, %c0_i32_0 : i32
    scf.if %2 {
      %c0_15 = arith.constant 0 : index
      %c0_16 = arith.constant 0 : index
      %21 = vector.load %arg2[%c0_15, %c0_16] : memref<2x128xf32, #tpu.memory_space<vmem>>, vector<2x128xf32>
      %c0_17 = arith.constant 0 : index
      %c0_18 = arith.constant 0 : index
      %22 = vector.load %arg7[%c0_17, %c0_18] : memref<2x128xf32, #tpu.memory_space<vmem>>, vector<2x128xf32>
      tpu.vector_store %arg7[%c0_17, %c0_18], %21 {strides = array<i32>} : memref<2x128xf32, #tpu.memory_space<vmem>>, vector<2x128xf32>,
    } else {
    }
    %c0 = arith.constant 0 : index
    %c0_1 = arith.constant 0 : index
    %3 = vector.load %arg7[%c0, %c0_1] : memref<2x128xf32, #tpu.memory_space<vmem>>, vector<2x128xf32>
    %c0_2 = arith.constant 0 : index
    %c0_3 = arith.constant 0 : index
    %c0_4 = arith.constant 0 : index
    %4 = vector.load %arg1[%c0_2, %c0_3, %c0_4] : memref<1x2x128xf32, #tpu.memory_space<vmem>>, vector<1x2x128xf32>
    %5 = vector.shape_cast %4 : vector<1x2x128xf32> to vector<2x128xf32>
    %6 = arith.truncf %3 : vector<2x128xf32> to vector<2x128xbf16>
    %c0_5 = arith.constant 0 : index
    %c0_6 = arith.constant 0 : index
    %7 = vector.load %arg3[%c0_5, %c0_6] : memref<128x128xbf16, #tpu.memory_space<vmem>>, vector<128x128xbf16>
    %cst = arith.constant dense<0.000000e+00> : vector<2x128xf32>
    %8 = tpu.matmul %6, %7, %cst {dimension_numbers = #tpu.dot_dimension_numbers<[1], [0], [0], [1], [0, 0, 1, 1], [], []>} : vector<2x128xbf16>, vector<128x128xbf16>, vector<2x128xf32> -> vector<2x128xf32>
    %9 = arith.addf %5, %8 : vector<2x128xf32>
    %c0_7 = arith.constant 0 : index
    %c0_8 = arith.constant 0 : index
    %10 = vector.load %arg4[%c0_7, %c0_8] : memref<1x128xf32, #tpu.memory_space<vmem>>, vector<1x128xf32>
    %11 = vector.broadcast %10 : vector<1x128xf32> to vector<2x128xf32>
    %12 = arith.addf %9, %11 : vector<2x128xf32>
    %13 = math.tanh %12 : vector<2x128xf32>
    %c0_9 = arith.constant 0 : index
    %c0_10 = arith.constant 0 : index
    %14 = vector.load %arg7[%c0_9, %c0_10] : memref<2x128xf32, #tpu.memory_space<vmem>>, vector<2x128xf32>
    tpu.vector_store %arg7[%c0_9, %c0_10], %13 {strides = array<i32>} : memref<2x128xf32, #tpu.memory_space<vmem>>, vector<2x128xf32>,
    %c0_11 = arith.constant 0 : index
    %c0_12 = arith.constant 0 : index
    %c0_13 = arith.constant 0 : index
    %15 = vector.load %arg5[%c0_11, %c0_12, %c0_13] : memref<1x2x128xf32, #tpu.memory_space<vmem>>, vector<1x2x128xf32>
    %16 = vector.shape_cast %15 : vector<1x2x128xf32> to vector<2x128xf32>
    %17 = vector.shape_cast %13 : vector<2x128xf32> to vector<1x2x128xf32>
    tpu.vector_store %arg5[%c0_11, %c0_12, %c0_13], %17 {strides = array<i32>} : memref<1x2x128xf32, #tpu.memory_space<vmem>>, vector<1x2x128xf32>,
    %c15_i32 = arith.constant 15 : i32
    %18 = arith.cmpi eq, %arg0, %c15_i32 : i32
    %19 = arith.extui %18 : i1 to i32
    %c0_i32_14 = arith.constant 0 : i32
    %20 = arith.cmpi ne, %19, %c0_i32_14 : i32
    scf.if %20 {
      %c0_15 = arith.constant 0 : index
      %c0_16 = arith.constant 0 : index
      %21 = vector.load %arg6[%c0_15, %c0_16] : memref<2x128xf32, #tpu.memory_space<vmem>>, vector<2x128xf32>
      tpu.vector_store %arg6[%c0_15, %c0_16], %13 {strides = array<i32>} : memref<2x128xf32, #tpu.memory_space<vmem>>, vector<2x128xf32>,
    } else {
    }
    return
  }
  func.func @transform_0(%arg0: i32) -> (i32, i32, i32) {
    %c0_i32 = arith.constant 0 : i32
    %c0_i32_0 = arith.constant 0 : i32
    %c0_i32_1 = arith.constant 0 : i32
    return %arg0, %c0_i32, %c0_i32_0 : i32, i32, i32
  }
  func.func @transform_1(%arg0: i32) -> (i32, i32) {
    %c0_i32 = arith.constant 0 : i32
    %c0_i32_0 = arith.constant 0 : i32
    %c0_i32_1 = arith.constant 0 : i32
    return %c0_i32, %c0_i32_0 : i32, i32
  }
  func.func @transform_2(%arg0: i32) -> (i32, i32) {
    %c0_i32 = arith.constant 0 : i32
    %c0_i32_0 = arith.constant 0 : i32
    %c0_i32_1 = arith.constant 0 : i32
    return %c0_i32, %c0_i32_0 : i32, i32
  }
  func.func @transform_3(%arg0: i32) -> (i32, i32) {
    %c0_i32 = arith.constant 0 : i32
    %c0_i32_0 = arith.constant 0 : i32
    %c0_i32_1 = arith.constant 0 : i32
    return %c0_i32, %c0_i32_0 : i32, i32
  }
  func.func @transform_4(%arg0: i32) -> (i32, i32, i32) {
    %c0_i32 = arith.constant 0 : i32
    %c0_i32_0 = arith.constant 0 : i32
    %c0_i32_1 = arith.constant 0 : i32
    return %arg0, %c0_i32, %c0_i32_0 : i32, i32, i32
  }
  func.func @transform_5(%arg0: i32) -> (i32, i32) {
    %c0_i32 = arith.constant 0 : i32
    %c0_i32_0 = arith.constant 0 : i32
    %c0_i32_1 = arith.constant 0 : i32
    return %c0_i32, %c0_i32_0 : i32, i32
  }
}

module attributes {stable_mosaic.version = 11 : i64} {
  func.func @_rnn_kernel(%arg0: i32, %arg1: memref<1x2x128xf32, #tpu.memory_space<vmem>>, %arg2: memref<2x128xf32, #tpu.memory_space<vmem>>, %arg3: memref<128x128xbf16, #tpu.memory_space<vmem>>, %arg4: memref<1x128xf32, #tpu.memory_space<vmem>>, %arg5: memref<1x2x128xf32, #tpu.memory_space<vmem>>, %arg6: memref<2x128xf32, #tpu.memory_space<vmem>>, %arg7: memref<2x128xf32, #tpu.memory_space<vmem>>) attributes {dimension_semantics = [#tpu.dimension_semantics<arbitrary>], iteration_bounds = array<i64: 7>, scalar_prefetch = 0 : i64, scratch_operands = 1 : i64, tpu.core_type = #tpu.core_type<tc>, window_params = [{transform_indices = @transform_0, window_bounds = array<i64: 1, 2, 128>}, {pipeline_mode = #tpu.pipeline_mode<synchronous>, transform_indices = @transform_1, window_bounds = array<i64: 2, 128>}, {pipeline_mode = #tpu.pipeline_mode<synchronous>, transform_indices = @transform_2, window_bounds = array<i64: 128, 128>}, {pipeline_mode = #tpu.pipeline_mode<synchronous>, transform_indices = @transform_3, window_bounds = array<i64: 1, 128>}, {transform_indices = @transform_4, window_bounds = array<i64: 1, 2, 128>}, {pipeline_mode = #tpu.pipeline_mode<synchronous>, transform_indices = @transform_5, window_bounds = array<i64: 2, 128>}]} {
    %c0_i32 = arith.constant 0 : i32
    %0 = arith.cmpi eq, %arg0, %c0_i32 : i32
    %1 = arith.extui %0 : i1 to i32
    %c0_i32_0 = arith.constant 0 : i32
    %2 = arith.cmpi ne, %1, %c0_i32_0 : i32
    scf.if %2 {
      %c0_15 = arith.constant 0 : index
      %c0_16 = arith.constant 0 : index
      %21 = vector.load %arg2[%c0_15, %c0_16] : memref<2x128xf32, #tpu.memory_space<vmem>>, vector<2x128xf32>
      %c0_17 = arith.constant 0 : index
      %c0_18 = arith.constant 0 : index
      %22 = vector.load %arg7[%c0_17, %c0_18] : memref<2x128xf32, #tpu.memory_space<vmem>>, vector<2x128xf32>
      tpu.vector_store %arg7[%c0_17, %c0_18], %21 {strides = array<i32>} : memref<2x128xf32, #tpu.memory_space<vmem>>, vector<2x128xf32>,
    } else {
    }
    %c0 = arith.constant 0 : index
    %c0_1 = arith.constant 0 : index
    %3 = vector.load %arg7[%c0, %c0_1] : memref<2x128xf32, #tpu.memory_space<vmem>>, vector<2x128xf32>
    %c0_2 = arith.constant 0 : index
    %c0_3 = arith.constant 0 : index
    %c0_4 = arith.constant 0 : index
    %4 = vector.load %arg1[%c0_2, %c0_3, %c0_4] : memref<1x2x128xf32, #tpu.memory_space<vmem>>, vector<1x2x128xf32>
    %5 = vector.shape_cast %4 : vector<1x2x128xf32> to vector<2x128xf32>
    %6 = arith.truncf %3 : vector<2x128xf32> to vector<2x128xbf16>
    %c0_5 = arith.constant 0 : index
    %c0_6 = arith.constant 0 : index
    %7 = vector.load %arg3[%c0_5, %c0_6] : memref<128x128xbf16, #tpu.memory_space<vmem>>, vector<128x128xbf16>
    %cst = arith.constant dense<0.000000e+00> : vector<2x128xf32>
    %8 = tpu.matmul %6, %7, %cst {dimension_numbers = #tpu.dot_dimension_numbers<[1], [0], [0], [1], [0, 0, 1, 1], [], []>} : vector<2x128xbf16>, vector<128x128xbf16>, vector<2x128xf32> -> vector<2x128xf32>
    %9 = arith.addf %5, %8 : vector<2x128xf32>
    %c0_7 = arith.constant 0 : index
    %c0_8 = arith.constant 0 : index
    %10 = vector.load %arg4[%c0_7, %c0_8] : memref<1x128xf32, #tpu.memory_space<vmem>>, vector<1x128xf32>
    %11 = vector.broadcast %10 : vector<1x128xf32> to vector<2x128xf32>
    %12 = arith.addf %9, %11 : vector<2x128xf32>
    %13 = math.tanh %12 : vector<2x128xf32>
    %c0_9 = arith.constant 0 : index
    %c0_10 = arith.constant 0 : index
    %14 = vector.load %arg7[%c0_9, %c0_10] : memref<2x128xf32, #tpu.memory_space<vmem>>, vector<2x128xf32>
    tpu.vector_store %arg7[%c0_9, %c0_10], %13 {strides = array<i32>} : memref<2x128xf32, #tpu.memory_space<vmem>>, vector<2x128xf32>,
    %c0_11 = arith.constant 0 : index
    %c0_12 = arith.constant 0 : index
    %c0_13 = arith.constant 0 : index
    %15 = vector.load %arg5[%c0_11, %c0_12, %c0_13] : memref<1x2x128xf32, #tpu.memory_space<vmem>>, vector<1x2x128xf32>
    %16 = vector.shape_cast %15 : vector<1x2x128xf32> to vector<2x128xf32>
    %17 = vector.shape_cast %13 : vector<2x128xf32> to vector<1x2x128xf32>
    tpu.vector_store %arg5[%c0_11, %c0_12, %c0_13], %17 {strides = array<i32>} : memref<1x2x128xf32, #tpu.memory_space<vmem>>, vector<1x2x128xf32>,
    %c6_i32 = arith.constant 6 : i32
    %18 = arith.cmpi eq, %arg0, %c6_i32 : i32
    %19 = arith.extui %18 : i1 to i32
    %c0_i32_14 = arith.constant 0 : i32
    %20 = arith.cmpi ne, %19, %c0_i32_14 : i32
    scf.if %20 {
      %c0_15 = arith.constant 0 : index
      %c0_16 = arith.constant 0 : index
      %21 = vector.load %arg6[%c0_15, %c0_16] : memref<2x128xf32, #tpu.memory_space<vmem>>, vector<2x128xf32>
      tpu.vector_store %arg6[%c0_15, %c0_16], %13 {strides = array<i32>} : memref<2x128xf32, #tpu.memory_space<vmem>>, vector<2x128xf32>,
    } else {
    }
    return
  }
  func.func @transform_0(%arg0: i32) -> (i32, i32, i32) {
    %c0_i32 = arith.constant 0 : i32
    %c0_i32_0 = arith.constant 0 : i32
    %c0_i32_1 = arith.constant 0 : i32
    return %arg0, %c0_i32, %c0_i32_0 : i32, i32, i32
  }
  func.func @transform_1(%arg0: i32) -> (i32, i32) {
    %c0_i32 = arith.constant 0 : i32
    %c0_i32_0 = arith.constant 0 : i32
    %c0_i32_1 = arith.constant 0 : i32
    return %c0_i32, %c0_i32_0 : i32, i32
  }
  func.func @transform_2(%arg0: i32) -> (i32, i32) {
    %c0_i32 = arith.constant 0 : i32
    %c0_i32_0 = arith.constant 0 : i32
    %c0_i32_1 = arith.constant 0 : i32
    return %c0_i32, %c0_i32_0 : i32, i32
  }
  func.func @transform_3(%arg0: i32) -> (i32, i32) {
    %c0_i32 = arith.constant 0 : i32
    %c0_i32_0 = arith.constant 0 : i32
    %c0_i32_1 = arith.constant 0 : i32
    return %c0_i32, %c0_i32_0 : i32, i32
  }
  func.func @transform_4(%arg0: i32) -> (i32, i32, i32) {
    %c0_i32 = arith.constant 0 : i32
    %c0_i32_0 = arith.constant 0 : i32
    %c0_i32_1 = arith.constant 0 : i32
    return %arg0, %c0_i32, %c0_i32_0 : i32, i32, i32
  }
  func.func @transform_5(%arg0: i32) -> (i32, i32) {
    %c0_i32 = arith.constant 0 : i32
    %c0_i32_0 = arith.constant 0 : i32
    %c0_i32_1 = arith.constant 0 : i32
    return %c0_i32, %c0_i32_0 : i32, i32
  }
}

module attributes {stable_mosaic.version = 11 : i64} {
  func.func @_attention_kernel(%arg0: memref<2x7x128xf32, #tpu.memory_space<vmem>>, %arg1: memref<2x16x128xf32, #tpu.memory_space<vmem>>, %arg2: memref<2x1x16xf32, #tpu.memory_space<vmem>>, %arg3: memref<128x128xbf16, #tpu.memory_space<vmem>>, %arg4: memref<128x128xbf16, #tpu.memory_space<vmem>>, %arg5: memref<128x128xbf16, #tpu.memory_space<vmem>>, %arg6: memref<2x7x128xf32, #tpu.memory_space<vmem>>, %arg7: memref<2x7x16xf32, #tpu.memory_space<vmem>>) attributes {dimension_semantics = [], scalar_prefetch = 0 : i64, scratch_operands = 0 : i64, tpu.core_type = #tpu.core_type<tc>} {
    %c0 = arith.constant 0 : index
    %c0_0 = arith.constant 0 : index
    %c0_1 = arith.constant 0 : index
    %0 = vector.load %arg0[%c0, %c0_0, %c0_1] : memref<2x7x128xf32, #tpu.memory_space<vmem>>, vector<2x7x128xf32>
    %c0_2 = arith.constant 0 : index
    %c0_3 = arith.constant 0 : index
    %c0_4 = arith.constant 0 : index
    %1 = vector.load %arg1[%c0_2, %c0_3, %c0_4] : memref<2x16x128xf32, #tpu.memory_space<vmem>>, vector<2x16x128xf32>
    %2 = arith.truncf %0 : vector<2x7x128xf32> to vector<2x7x128xbf16>
    %3 = arith.truncf %1 : vector<2x16x128xf32> to vector<2x16x128xbf16>
    %c0_5 = arith.constant 0 : index
    %c0_6 = arith.constant 0 : index
    %4 = vector.load %arg3[%c0_5, %c0_6] : memref<128x128xbf16, #tpu.memory_space<vmem>>, vector<128x128xbf16>
    %5 = vector.shape_cast %4 : vector<128x128xbf16> to vector<1x128x128xbf16>
    %6 = vector.broadcast %5 : vector<1x128x128xbf16> to vector<2x128x128xbf16>
    %c0_7 = arith.constant 0 : index
    %c0_8 = arith.constant 0 : index
    %7 = vector.load %arg4[%c0_7, %c0_8] : memref<128x128xbf16, #tpu.memory_space<vmem>>, vector<128x128xbf16>
    %8 = vector.shape_cast %7 : vector<128x128xbf16> to vector<1x128x128xbf16>
    %9 = vector.broadcast %8 : vector<1x128x128xbf16> to vector<2x128x128xbf16>
    %c0_9 = arith.constant 0 : index
    %c0_10 = arith.constant 0 : index
    %10 = vector.load %arg5[%c0_9, %c0_10] : memref<128x128xbf16, #tpu.memory_space<vmem>>, vector<128x128xbf16>
    %11 = vector.shape_cast %10 : vector<128x128xbf16> to vector<1x128x128xbf16>
    %12 = vector.broadcast %11 : vector<1x128x128xbf16> to vector<2x128x128xbf16>
    "tpu.trace_start"() <{level = 10 : i32, message = "bth,bhk->btk"}> : () -> ()
    %cst = arith.constant dense<0.000000e+00> : vector<2x7x128xf32>
    %13 = tpu.matmul %2, %6, %cst {dimension_numbers = #tpu.dot_dimension_numbers<[2], [1], [1], [2], [0, 0, 0, 1, 1, 2], [0], [0]>} : vector<2x7x128xbf16>, vector<2x128x128xbf16>, vector<2x7x128xf32> -> vector<2x7x128xf32>
    "tpu.trace_stop"() : () -> ()
    %14 = arith.truncf %13 : vector<2x7x128xf32> to vector<2x7x128xbf16>
    "tpu.trace_start"() <{level = 10 : i32, message = "btk,bsk->bts"}> : () -> ()
    %cst_11 = arith.constant dense<0.000000e+00> : vector<2x7x16xf32>
    %15 = tpu.matmul %14, %3, %cst_11 {dimension_numbers = #tpu.dot_dimension_numbers<[2], [2], [1], [1], [0, 0, 0, 1, 1, 1], [0], [0]>} : vector<2x7x128xbf16>, vector<2x16x128xbf16>, vector<2x7x16xf32> -> vector<2x7x16xf32>
    "tpu.trace_stop"() : () -> ()
    %c0_12 = arith.constant 0 : index
    %c0_13 = arith.constant 0 : index
    %c0_14 = arith.constant 0 : index
    %16 = vector.load %arg2[%c0_12, %c0_13, %c0_14] : memref<2x1x16xf32, #tpu.memory_space<vmem>>, vector<2x1x16xf32>
    %cst_15 = arith.constant 0.000000e+00 : f32
    %17 = vector.broadcast %cst_15 : f32 to vector<2x1x16xf32>
    %18 = arith.cmpf ogt, %16, %17 : vector<2x1x16xf32>
    %cst_16 = arith.constant -1.000000e+09 : f32
    %19 = vector.shape_cast %18 : vector<2x1x16xi1> to vector<2x1x16xi1>
    %20 = vector.broadcast %19 : vector<2x1x16xi1> to vector<2x7x16xi1>
    %21 = vector.broadcast %cst_16 : f32 to vector<2x7x16xf32>
    %22 = arith.select %20, %15, %21 : vector<2x7x16xi1>, vector<2x7x16xf32>
    %cst_17 = arith.constant dense<0xFF800000> : vector<2x7xf32>
    %23 = vector.multi_reduction <maximumf>, %22, %cst_17 [2] : vector<2x7x16xf32> to vector<2x7xf32>
    %24 = vector.shape_cast %23 : vector<2x7xf32> to vector<2x7x1xf32>
    %25 = vector.broadcast %24 : vector<2x7x1xf32> to vector<2x7x16xf32>
    %26 = arith.subf %22, %25 : vector<2x7x16xf32>
    %27 = math.exp %26 : vector<2x7x16xf32>
    %cst_18 = arith.constant dense<0.000000e+00> : vector<2x7xf32>
    %28 = vector.multi_reduction <add>, %27, %cst_18 [2] : vector<2x7x16xf32> to vector<2x7xf32>
    %29 = vector.shape_cast %28 : vector<2x7xf32> to vector<2x7x1xf32>
    %cst_19 = arith.constant 1.000000e-30 : f32
    %30 = vector.broadcast %cst_19 : f32 to vector<2x7x1xf32>
    %31 = arith.maximumf %29, %30 : vector<2x7x1xf32>
    %32 = tpu.reciprocal %31 {approx = true} : vector<2x7x1xf32> -> vector<2x7x1xf32>
    %33 = vector.broadcast %32 : vector<2x7x1xf32> to vector<2x7x16xf32>
    %34 = arith.mulf %27, %33 : vector<2x7x16xf32>
    %35 = arith.truncf %34 : vector<2x7x16xf32> to vector<2x7x16xbf16>
    "tpu.trace_start"() <{level = 10 : i32, message = "bts,bsh->bth"}> : () -> ()
    %cst_20 = arith.constant dense<0.000000e+00> : vector<2x7x128xf32>
    %36 = tpu.matmul %35, %3, %cst_20 {dimension_numbers = #tpu.dot_dimension_numbers<[2], [1], [1], [2], [0, 0, 0, 1, 1, 2], [0], [0]>} : vector<2x7x16xbf16>, vector<2x16x128xbf16>, vector<2x7x128xf32> -> vector<2x7x128xf32>
    "tpu.trace_stop"() : () -> ()
    %37 = arith.truncf %36 : vector<2x7x128xf32> to vector<2x7x128xbf16>
    "tpu.trace_start"() <{level = 10 : i32, message = "bth,bhk->btk"}> : () -> ()
    %cst_21 = arith.constant dense<0.000000e+00> : vector<2x7x128xf32>
    %38 = tpu.matmul %37, %9, %cst_21 {dimension_numbers = #tpu.dot_dimension_numbers<[2], [1], [1], [2], [0, 0, 0, 1, 1, 2], [0], [0]>} : vector<2x7x128xbf16>, vector<2x128x128xbf16>, vector<2x7x128xf32> -> vector<2x7x128xf32>
    %cst_22 = arith.constant dense<0.000000e+00> : vector<2x7x128xf32>
    %39 = tpu.matmul %2, %12, %cst_22 {dimension_numbers = #tpu.dot_dimension_numbers<[2], [1], [1], [2], [0, 0, 0, 1, 1, 2], [0], [0]>} : vector<2x7x128xbf16>, vector<2x128x128xbf16>, vector<2x7x128xf32> -> vector<2x7x128xf32>
    "tpu.trace_stop"() : () -> ()
    %40 = arith.addf %38, %39 : vector<2x7x128xf32>
    %41 = math.tanh %40 : vector<2x7x128xf32>
    %c0_23 = arith.constant 0 : index
    %c0_24 = arith.constant 0 : index
    %c0_25 = arith.constant 0 : index
    %42 = vector.load %arg6[%c0_23, %c0_24, %c0_25] : memref<2x7x128xf32, #tpu.memory_space<vmem>>, vector<2x7x128xf32>
    tpu.vector_store %arg6[%c0_23, %c0_24, %c0_25], %41 {strides = array<i32>} : memref<2x7x128xf32, #tpu.memory_space<vmem>>, vector<2x7x128xf32>,
    %c0_26 = arith.constant 0 : index
    %c0_27 = arith.constant 0 : index
    %c0_28 = arith.constant 0 : index
    %43 = vector.load %arg7[%c0_26, %c0_27, %c0_28] : memref<2x7x16xf32, #tpu.memory_space<vmem>>, vector<2x7x16xf32>
    tpu.vector_store %arg7[%c0_26, %c0_27, %c0_28], %34 {strides = array<i32>} : memref<2x7x16xf32, #tpu.memory_space<vmem>>, vector<2x7x16xf32>,
    return
  }
}

</mosaic_0001>

<llo_original>
// kernel: pointer_generator_forward.3
$region0: #{pointer_generator_forward.3}
  #allocation0 [shape = 'u32[]', space=smem, size = 0x4, offset = 0x4, fixed_abs, tag = 'smem constant byte address 0x4 - core index']
  #allocation1 [shape = 'u32[144,128]{1,0:T(1,128)}', space=vmem, size = 0x12000, scoped, tag = 'internal scratch']
  #allocation2 [shape = 'f32[2,128]{1,0:T(2,128)}', space=vmem, size = 0x400, scoped, tag = 'scratch operand']
  %s0 = inlined_call_operand.vmem [shape: f32[16,2,128], index: 0, kind: input, shape index: {}]
  %s1 = inlined_call_operand.vmem [shape: f32[2,128], index: 1, kind: input, shape index: {}]
  %s2 = inlined_call_operand.vmem [shape: bf16[128,128], index: 2, kind: input, shape index: {}]
  %s3 = inlined_call_operand.vmem [shape: f32[1,128], index: 3, kind: input, shape index: {}]
  %s4 = inlined_call_operand.vmem [shape: f32[16,2,128], index: 4, kind: output, shape index: {0}]
  %s5 = inlined_call_operand.vmem [shape: f32[2,128], index: 5, kind: output, shape index: {1}]
  %6 = xla_tuple %s4, %s5
  %s7 = sld [smem:[#allocation0]]
  $region65: #{pointer_generator_forward.3} parent=0
    _
  %s9 = ssub.s32 1, %s7
  %s10 = scalar_select 0, %s9, %s7
  loop: start=0, step=1, limit=18
  $region2: #{pointer_generator_forward.3} parent=0 // loop_pre_header
    _
  $region3: #{pointer_generator_forward.3} parent=0 // loop_header
    %s12 = sphi 0, %s16
    %p13 = scmp.ge.s32.totalorder %s12, 18
    %s22 = sphi 0, %s24
    %s25 = sphi 0, %s22
    %s26 = sphi 0, %s25
    %s42 = sphi 0, %s26
    %s46 = sphi 0, %s46
    %s48 = sphi 0, %s46
    %s49 = sphi 0, %s48
    %s63 = sphi 0, %s49
    %s67 = sphi 0, %s67
    %s69 = sphi 0, %s67
    %s70 = sphi 0, %s69
    %s84 = sphi 0, %s70
    %s88 = sphi 0, %s88
    %s90 = sphi 0, %s88
    %s91 = sphi 0, %s90
    %s105 = sphi 0, %s91
    %s111 = sphi 0, %s113
    %s114 = sphi 0, %s111
    %s115 = sphi 0, %s114
    %s131 = sphi 0, %s115
    %s135 = sphi 0, %s135
    %s137 = sphi 0, %s135
    %s138 = sphi 0, %s137
    %s152 = sphi 0, %s138
  $region4: #{pointer_generator_forward.3} parent=0 // loop_header_branch
    %15 = sbr.rel (%p13) target = $region8
  $region5: #{pointer_generator_forward.3} parent=0 // loop_body
    %s17 = ssub.s32 %s12, 1
    %s18 = ssub.s32 %s12, 2
    %s19 = sadd.s32 %s12, 1
    %s20 = ssub.s32 %s12, %s19
    %p21 = scmp.eq.s32.totalorder %s20, 0
    %s23 = sadd.s32 %s22, 1
    %s24 = scalar_select %p21, %s22, %s23
    %p27 = pneg %p21
    %p28 = scmp.eq.s32.totalorder %s12, 15
    %p29 = por %p27, %p28
    %p30 = scmp.ne.s32.totalorder %s22, %s25
    %p31 = scmp.eq.s32.totalorder %s12, 0
    %p32 = por %p30, %p31
    %p33 = scmp.ne.s32.totalorder %s22, %s25
    %p34 = scmp.eq.s32.totalorder %s17, 15
    %p35 = por %p33, %p34
    %p36 = scmp.ne.s32.totalorder %s25, %s26
    %p37 = scmp.eq.s32.totalorder %s17, 0
    %p38 = por %p36, %p37
    %p39 = scmp.ne.s32.totalorder %s25, %s26
    %p40 = scmp.eq.s32.totalorder %s18, 15
    %p41 = por %p39, %p40
    %p43 = scmp.ne.s32.totalorder %s26, %s42
    %p44 = scmp.eq.s32.totalorder %s18, 0
    %p45 = por %p43, %p44
    %s47 = sadd.s32 %s46, 1
    %p50 = scmp.eq.s32.totalorder %s12, 15
    %p51 = scmp.ne.s32.totalorder %s46, %s48
    %p52 = scmp.eq.s32.totalorder %s12, 0
    %p53 = por %p51, %p52
    %p54 = scmp.ne.s32.totalorder %s46, %s48
    %p55 = scmp.eq.s32.totalorder %s17, 15
    %p56 = por %p54, %p55
    %p57 = scmp.ne.s32.totalorder %s48, %s49
    %p58 = scmp.eq.s32.totalorder %s17, 0
    %p59 = por %p57, %p58
    %p60 = scmp.ne.s32.totalorder %s48, %s49
    %p61 = scmp.eq.s32.totalorder %s18, 15
    %p62 = por %p60, %p61
    %p64 = scmp.ne.s32.totalorder %s49, %s63
    %p65 = scmp.eq.s32.totalorder %s18, 0
    %p66 = por %p64, %p65
    %s68 = sadd.s32 %s67, 1
    %p71 = scmp.eq.s32.totalorder %s12, 15
    %p72 = scmp.ne.s32.totalorder %s67, %s69
    %p73 = scmp.eq.s32.totalorder %s12, 0
    %p74 = por %p72, %p73
    %p75 = scmp.ne.s32.totalorder %s67, %s69
    %p76 = scmp.eq.s32.totalorder %s17, 15
    %p77 = por %p75, %p76
    %p78 = scmp.ne.s32.totalorder %s69, %s70
    %p79 = scmp.eq.s32.totalorder %s17, 0
    %p80 = por %p78, %p79
    %p81 = scmp.ne.s32.totalorder %s69, %s70
    %p82 = scmp.eq.s32.totalorder %s18, 15
    %p83 = por %p81, %p82
    %p85 = scmp.ne.s32.totalorder %s70, %s84
    %p86 = scmp.eq.s32.totalorder %s18, 0
    %p87 = por %p85, %p86
    %s89 = sadd.s32 %s88, 1
    %p92 = scmp.eq.s32.totalorder %s12, 15
    %p93 = scmp.ne.s32.totalorder %s88, %s90
    %p94 = scmp.eq.s32.totalorder %s12, 0
    %p95 = por %p93, %p94
    %p96 = scmp.ne.s32.totalorder %s88, %s90
    %p97 = scmp.eq.s32.totalorder %s17, 15
    %p98 = por %p96, %p97
    %p99 = scmp.ne.s32.totalorder %s90, %s91
    %p100 = scmp.eq.s32.totalorder %s17, 0
    %p101 = por %p99, %p100
    %p102 = scmp.ne.s32.totalorder %s90, %s91
    %p103 = scmp.eq.s32.totalorder %s18, 15
    %p104 = por %p102, %p103
    %p106 = scmp.ne.s32.totalorder %s91, %s105
    %p107 = scmp.eq.s32.totalorder %s18, 0
    %p108 = por %p106, %p107
    %s109 = ssub.s32 %s12, %s19
    %p110 = scmp.eq.s32.totalorder %s109, 0
    %s112 = sadd.s32 %s111, 1
    %s113 = scalar_select %p110, %s111, %s112
    %p116 = pneg %p110
    %p117 = scmp.eq.s32.totalorder %s12, 15
    %p118 = por %p116, %p117
    %p119 = scmp.ne.s32.totalorder %s111, %s114
    %p120 = scmp.eq.s32.totalorder %s12, 0
    %p121 = por %p119, %p120
    %p122 = scmp.ne.s32.totalorder %s111, %s114
    %p123 = scmp.eq.s32.totalorder %s17, 15
    %p124 = por %p122, %p123
    %p125 = scmp.ne.s32.totalorder %s114, %s115
    %p126 = scmp.eq.s32.totalorder %s17, 0
    %p127 = por %p125, %p126
    %p128 = scmp.ne.s32.totalorder %s114, %s115
    %p129 = scmp.eq.s32.totalorder %s18, 15
    %p130 = por %p128, %p129
    %p132 = scmp.ne.s32.totalorder %s115, %s131
    %p133 = scmp.eq.s32.totalorder %s18, 0
    %p134 = por %p132, %p133
    %s136 = sadd.s32 %s135, 1
    %p139 = scmp.eq.s32.totalorder %s12, 15
    %p140 = scmp.ne.s32.totalorder %s135, %s137
    %p141 = scmp.eq.s32.totalorder %s12, 0
    %p142 = por %p140, %p141
    %p143 = scmp.ne.s32.totalorder %s135, %s137
    %p144 = scmp.eq.s32.totalorder %s17, 15
    %p145 = por %p143, %p144
    %p146 = scmp.ne.s32.totalorder %s137, %s138
    %p147 = scmp.eq.s32.totalorder %s17, 0
    %p148 = por %p146, %p147
    %p149 = scmp.ne.s32.totalorder %s137, %s138
    %p150 = scmp.eq.s32.totalorder %s18, 15
    %p151 = por %p149, %p150
    %p153 = scmp.ne.s32.totalorder %s138, %s152
    %p154 = scmp.eq.s32.totalorder %s18, 0
    %p155 = por %p153, %p154
    %p156 = scmp.le.s32.totalorder 1, %s12
    %p157 = scmp.lt.s32.totalorder %s12, 17
    %p158 = pnand %p156, %p157
    %p159 = pneg %p158
    // Predicated region
    $region9: #{pointer_generator_forward.3} parent=5 // pred_check
      _
    $region10: #{pointer_generator_forward.3} parent=5 // pred_check_branch
      %161 = sbr.rel (%p158) target = $region12
    $region11: #{pointer_generator_forward.3} parent=5 // pred_region
      %s162 = ssub.s32 %s12, 1
      // Predicated region
      $region13: #{pointer_generator_forward.3} parent=11 // pred_check
        %p163 = pneg %p59
      $region14: #{pointer_generator_forward.3} parent=11 // pred_check_branch
        %165 = sbr.rel (%p163) target = $region16
      $region15: #{pointer_generator_forward.3} parent=11 // pred_region
        _
      $region16: #{pointer_generator_forward.3} parent=11 // pred_fallthru
        _
      // Predicated region
      $region17: #{pointer_generator_forward.3} parent=11 // pred_check
        %p166 = pneg %p80
      $region18: #{pointer_generator_forward.3} parent=11 // pred_check_branch
        %168 = sbr.rel (%p166) target = $region20
      $region19: #{pointer_generator_forward.3} parent=11 // pred_region
        _
      $region20: #{pointer_generator_forward.3} parent=11 // pred_fallthru
        _
      // Predicated region
      $region21: #{pointer_generator_forward.3} parent=11 // pred_check
        %p169 = pneg %p101
      $region22: #{pointer_generator_forward.3} parent=11 // pred_check_branch
        %171 = sbr.rel (%p169) target = $region24
      $region23: #{pointer_generator_forward.3} parent=11 // pred_region
        _
      $region24: #{pointer_generator_forward.3} parent=11 // pred_fallthru
        _
    $region12: #{pointer_generator_forward.3} parent=5 // pred_fallthru
      _
    %p172 = scmp.lt.s32.totalorder %s12, 16
    // Predicated region
    $region25: #{pointer_generator_forward.3} parent=5 // pred_check
      %p173 = pneg %p172
    $region26: #{pointer_generator_forward.3} parent=5 // pred_check_branch
      %175 = sbr.rel (%p173) target = $region28
    $region27: #{pointer_generator_forward.3} parent=5 // pred_region
      // Predicated region
      $region29: #{pointer_generator_forward.3} parent=27 // pred_check
        %p176 = pneg %p32
      $region30: #{pointer_generator_forward.3} parent=27 // pred_check_branch
        %178 = sbr.rel (%p176) target = $region32
      $region31: #{pointer_generator_forward.3} parent=27 // pred_region
        %p179 = scmp.lt.s32.totalorder %s12, 15
        %s180 = scalar_select %p179, %s12, 15
        %s181 = smul.addr %s180, 2
        %s182 = scalar_lea.vmem %s0, %s181
      $region32: #{pointer_generator_forward.3} parent=27 // pred_fallthru
        _
    $region28: #{pointer_generator_forward.3} parent=5 // pred_fallthru
      _
    %p183 = scmp.le.s32.totalorder 1, %s12
    %p184 = scmp.lt.s32.totalorder %s12, 17
    %p185 = pnand %p183, %p184
    %p186 = pneg %p185
    // Predicated region
    $region33: #{pointer_generator_forward.3} parent=5 // pred_check
      _
    $region34: #{pointer_generator_forward.3} parent=5 // pred_check_branch
      %188 = sbr.rel (%p185) target = $region36
    $region35: #{pointer_generator_forward.3} parent=5 // pred_region
      %s189 = ssub.s32 %s12, 1
      %p190 = scmp.lt.s32.totalorder %s17, 15
      %s191 = scalar_select %p190, %s17, 15
      %s192 = smul.addr %s191, 2
      %s193 = scalar_lea.vmem %s0, %s192
      %p194 = pneg %p38
      %p195 = pneg %p35
      %p196 = pneg %p59
      %p197 = pneg %p56
      %p198 = pneg %p80
      %p199 = pneg %p77
      %p200 = pneg %p101
      %p201 = pneg %p98
      %p202 = pneg %p127
      %p203 = pneg %p124
      %p204 = scmp.lt.s32.totalorder %s17, 15
      %s205 = scalar_select %p204, %s17, 15
      %s206 = smul.addr %s205, 2
      %s207 = scalar_lea.vmem %s4, %s206
      %p208 = pneg %p148
      %p209 = pneg %p145
      %p210 = scmp.lt.s32.totalorder %s17, 15
      %s211 = scalar_select %p210, %s17, 15
      %s212 = smul.addr %s211, 2
      %s213 = scalar_lea.vmem %s0, %s212
      %p214 = scmp.lt.s32.totalorder %s17, 15
      %s215 = scalar_select %p214, %s17, 15
      %s216 = smul.addr %s215, 2
      %s217 = scalar_lea.vmem %s4, %s216
      %p219 = scmp.eq.s32.totalorder %s17, 0
      // Predicated region
      $region37: #{pointer_generator_forward.3} parent=35 // pred_check
        %p220 = pneg %p219
      $region38: #{pointer_generator_forward.3} parent=35 // pred_check_branch
        %222 = sbr.rel (%p220) target = $region40
      $region39: #{pointer_generator_forward.3} parent=35 // pred_region
        %v223 = vld [vmem:[%s1] sm:$0x3]
        %224 = vst [vmem:[#allocation2] sm:$0x3] %v223
      $region40: #{pointer_generator_forward.3} parent=35 // pred_fallthru
        _
      %v225 = vld [vmem:[#allocation2] sm:$0x3]
      %v226 = vld [vmem:[%s213] sm:$0x3]
      %v227 = vpack.c.bf16 %v225, %v225
      %v228 = vld [vmem:[%s2] sm:$0xf]
      %v229 = vld [vmem:[%s2 + $0x4] sm:$0xf]
      %v230 = vld [vmem:[%s2 + $0x8] sm:$0xf]
      %v231 = vld [vmem:[%s2 + $0xc] sm:$0xf]
      %v232 = vld [vmem:[%s2 + $0x10] sm:$0xf]
      %v233 = vld [vmem:[%s2 + $0x14] sm:$0xf]
      %v234 = vld [vmem:[%s2 + $0x18] sm:$0xf]
      %v235 = vld [vmem:[%s2 + $0x1c] sm:$0xf]
      %v236 = vld [vmem:[%s2 + $0x20] sm:$0xf]
      %v237 = vld [vmem:[%s2 + $0x24] sm:$0xf]
      %v238 = vld [vmem:[%s2 + $0x28] sm:$0xf]
      %v239 = vld [vmem:[%s2 + $0x2c] sm:$0xf]
      %v240 = vld [vmem:[%s2 + $0x30] sm:$0xf]
      %v241 = vld [vmem:[%s2 + $0x34] sm:$0xf]
      %v242 = vld [vmem:[%s2 + $0x38] sm:$0xf]
      %v243 = vld [vmem:[%s2 + $0x3c] sm:$0xf]
      %v260 = vunpack.c.l.b16 %v228
      %v261 = vunpack.c.l.b16 %v229
      %v262 = vunpack.c.l.b16 %v230
      %v263 = vunpack.c.l.b16 %v231
      %v264 = vunpack.c.l.b16 %v232
      %v265 = vunpack.c.l.b16 %v233
      %v266 = vunpack.c.l.b16 %v234
      %v267 = vunpack.c.l.b16 %v235
      %v268 = vunpack.c.l.b16 %v236
      %v269 = vunpack.c.l.b16 %v237
      %v270 = vunpack.c.l.b16 %v238
      %v271 = vunpack.c.l.b16 %v239
      %v272 = vunpack.c.l.b16 %v240
      %v273 = vunpack.c.l.b16 %v241
      %v274 = vunpack.c.l.b16 %v242
      %v275 = vunpack.c.l.b16 %v243
      %v276 = vpack.c.b16 %v261, %v260
      %v277 = vpack.c.b16 %v263, %v262
      %v278 = vpack.c.b16 %v265, %v264
      %v279 = vpack.c.b16 %v267, %v266
      %v280 = vpack.c.b16 %v269, %v268
      %v281 = vpack.c.b16 %v271, %v270
      %v282 = vpack.c.b16 %v273, %v272
      %v283 = vpack.c.b16 %v275, %v274
      %292 = vmatprep.subr.bf16.mxu0 0
      %293 = vmatpush1.bf16.msra.mxu0 %v276
      %294 = vmatprep.subr.bf16.mxu0 0
      %295 = vmatpush1.bf16.msra.mxu0 %v277
      %296 = vmatprep.subr.bf16.mxu0 0
      %297 = vmatpush1.bf16.msra.mxu0 %v278
      %298 = vmatprep.subr.bf16.mxu0 0
      %299 = vmatpush1.bf16.msra.mxu0 %v279
      %300 = vmatprep.subr.bf16.mxu0 0
      %301 = vmatpush1.bf16.msra.mxu0 %v280
      %302 = vmatprep.subr.bf16.mxu0 0
      %303 = vmatpush1.bf16.msra.mxu0 %v281
      %304 = vmatprep.subr.bf16.mxu0 0
      %305 = vmatpush1.bf16.msra.mxu0 %v282
      %306 = vmatprep.subr.bf16.mxu0 0
      %307 = vmatpush1.bf16.msra.mxu0 %v283
      %308 = vmatprep.subr.bf16.mxu0 0
      %309 = vmatpush1.bf16.msra.mxu0 0
      %310 = vmatprep.subr.bf16.mxu0 0
      %311 = vmatpush1.bf16.msra.mxu0 0
      %312 = vmatprep.subr.bf16.mxu0 0
      %313 = vmatpush1.bf16.msra.mxu0 0
      %314 = vmatprep.subr.bf16.mxu0 0
      %315 = vmatpush1.bf16.msra.mxu0 0
      %316 = vmatprep.subr.bf16.mxu0 0
      %317 = vmatpush1.bf16.msra.mxu0 0
      %318 = vmatprep.subr.bf16.mxu0 0
      %319 = vmatpush1.bf16.msra.mxu0 0
      %320 = vmatprep.subr.bf16.mxu0 0
      %321 = vmatpush1.bf16.msra.mxu0 0
      %322 = vmatprep.subr.bf16.mxu0 0
      %323 = vmatpush1.bf16.msra.mxu0 0
      %324 = vmatprep.mubr.bf16.mxu0 0
      %325 = vmatmul.mubr.bf16.gmra.mrb[0].mxu0 %v227
      %v326 = vpop.f32.mrb[0].mxu0
      %v327 = vadd.f32 0.0, %v326
      %v328 = vpop.f32.mrb[0].mxu0
      %v329 = vpop.f32.mrb[0].mxu0
      %v330 = vpop.f32.mrb[0].mxu0
      %331 = vdwg.mxu0
      %v332 = vadd.f32 %v226, %v327
      %v333 = vld [vmem:[%s3] sm:$0x1]
      %v335 = vlaneseq
      %v336 = vshrl.u32 %v335, 7
      %v337 = vsub.s32 0, %v336
      %v338 = vrot.slane %v333, %v337
      %v340 = vadd.f32 %v332, %v338
      %v341 = vtanh.pop %v340
      %342 = vst [vmem:[#allocation2] sm:$0x3] %v341
      %343 = vst [vmem:[%s217] sm:$0x3] %v341
      %p344 = scmp.eq.s32.totalorder %s17, 15
      // Predicated region
      $region41: #{pointer_generator_forward.3} parent=35 // pred_check
        %p345 = pneg %p344
      $region42: #{pointer_generator_forward.3} parent=35 // pred_check_branch
        %347 = sbr.rel (%p345) target = $region44
      $region43: #{pointer_generator_forward.3} parent=35 // pred_region
        %348 = vst [vmem:[%s5] sm:$0x3] %v341
      $region44: #{pointer_generator_forward.3} parent=35 // pred_fallthru
        _
      %p349 = scmp.lt.s32.totalorder %s17, 15
      %s350 = scalar_select %p349, %s17, 15
      %s351 = smul.addr %s350, 2
      %s352 = scalar_lea.vmem %s4, %s351
      // Predicated region
      $region45: #{pointer_generator_forward.3} parent=35 // pred_check
        %p353 = pneg %p124
      $region46: #{pointer_generator_forward.3} parent=35 // pred_check_branch
        %355 = sbr.rel (%p353) target = $region48
      $region47: #{pointer_generator_forward.3} parent=35 // pred_region
        _
      $region48: #{pointer_generator_forward.3} parent=35 // pred_fallthru
        _
      // Predicated region
      $region49: #{pointer_generator_forward.3} parent=35 // pred_check
        %p356 = pneg %p145
      $region50: #{pointer_generator_forward.3} parent=35 // pred_check_branch
        %358 = sbr.rel (%p356) target = $region52
      $region51: #{pointer_generator_forward.3} parent=35 // pred_region
        _
      $region52: #{pointer_generator_forward.3} parent=35 // pred_fallthru
        _
      // Predicated region
      $region53: #{pointer_generator_forward.3} parent=35 // pred_check
        %p359 = pneg %p145
      $region54: #{pointer_generator_forward.3} parent=35 // pred_check_branch
        %361 = sbr.rel (%p359) target = $region56
      $region55: #{pointer_generator_forward.3} parent=35 // pred_region
        _
      $region56: #{pointer_generator_forward.3} parent=35 // pred_fallthru
        _
    $region36: #{pointer_generator_forward.3} parent=5 // pred_fallthru
      _
    %p362 = scmp.le.s32.totalorder 2, %s12
    // Predicated region
    $region57: #{pointer_generator_forward.3} parent=5 // pred_check
      %p363 = pneg %p362
    $region58: #{pointer_generator_forward.3} parent=5 // pred_check_branch
      %365 = sbr.rel (%p363) target = $region60
    $region59: #{pointer_generator_forward.3} parent=5 // pred_region
      %s366 = ssub.s32 %s12, 2
      // Predicated region
      $region61: #{pointer_generator_forward.3} parent=59 // pred_check
        %p367 = pneg %p130
      $region62: #{pointer_generator_forward.3} parent=59 // pred_check_branch
        %369 = sbr.rel (%p367) target = $region64
      $region63: #{pointer_generator_forward.3} parent=59 // pred_region
        %p370 = scmp.lt.s32.totalorder %s18, 15
        %s371 = scalar_select %p370, %s18, 15
        %s372 = smul.addr %s371, 2
        %s373 = scalar_lea.vmem %s4, %s372
      $region64: #{pointer_generator_forward.3} parent=59 // pred_fallthru
        _
    $region60: #{pointer_generator_forward.3} parent=5 // pred_fallthru
      _
  $region6: #{pointer_generator_forward.3} parent=0 // loop_footer
    %s16 = sadd.s32 1, %s12
  $region7: #{pointer_generator_forward.3} parent=0 // loop_footer_branch
    %11 = sbr.rel target = $region3
  $region8: #{pointer_generator_forward.3} parent=0 // loop_exit
    _

// kernel: pointer_generator_forward.4
$region0: #{pointer_generator_forward.4}
  #allocation0 [shape = 'u32[]', space=smem, size = 0x4, offset = 0x4, fixed_abs, tag = 'smem constant byte address 0x4 - core index']
  #allocation1 [shape = 'u32[144,128]{1,0:T(1,128)}', space=vmem, size = 0x12000, scoped, tag = 'internal scratch']
  #allocation2 [shape = 'f32[2,128]{1,0:T(2,128)}', space=vmem, size = 0x400, scoped, tag = 'scratch operand']
  %s0 = inlined_call_operand.vmem [shape: f32[7,2,128], index: 0, kind: input, shape index: {}]
  %s1 = inlined_call_operand.vmem [shape: f32[2,128], index: 1, kind: input, shape index: {}]
  %s2 = inlined_call_operand.vmem [shape: bf16[128,128], index: 2, kind: input, shape index: {}]
  %s3 = inlined_call_operand.vmem [shape: f32[1,128], index: 3, kind: input, shape index: {}]
  %s4 = inlined_call_operand.vmem [shape: f32[7,2,128], index: 4, kind: output, shape index: {0}]
  %s5 = inlined_call_operand.hbm [shape: f32[2,128], index: 5, kind: output, shape index: {1}]
  %6 = xla_tuple %s4, %s5
  %s7 = sld [smem:[#allocation0]]
  $region65: #{pointer_generator_forward.4} parent=0
    _
  %s9 = ssub.s32 1, %s7
  %s10 = scalar_select 0, %s9, %s7
  $region1: #{pointer_generator_forward.4} parent=0
    #allocation3 [shape = 'u8[1024]{0}', space=vmem, size = 0x400, scoped, tag = 'output window, operand 1, single buffered']
    #allocation4 [shape = 's32[2]{0}', space=sflag, size = 0x8, scoped, tag = 'scoped memory for pointer_generator_forward.4']
    %11 = vsyncpa [#allocation4], 0
    loop: start=0, step=1, limit=9
    $region2: #{pointer_generator_forward.4} parent=1 // loop_pre_header
      _
    $region3: #{pointer_generator_forward.4} parent=1 // loop_header
      %s13 = sphi 0, %s17
      %p14 = scmp.ge.s32.totalorder %s13, 9
      %s23 = sphi 0, %s25
      %s26 = sphi 0, %s23
      %s27 = sphi 0, %s26
      %s43 = sphi 0, %s27
      %s47 = sphi 0, %s47
      %s49 = sphi 0, %s47
      %s50 = sphi 0, %s49
      %s64 = sphi 0, %s50
      %s68 = sphi 0, %s68
      %s70 = sphi 0, %s68
      %s71 = sphi 0, %s70
      %s85 = sphi 0, %s71
      %s89 = sphi 0, %s89
      %s91 = sphi 0, %s89
      %s92 = sphi 0, %s91
      %s106 = sphi 0, %s92
      %s112 = sphi 0, %s114
      %s115 = sphi 0, %s112
      %s116 = sphi 0, %s115
      %s132 = sphi 0, %s116
      %s136 = sphi 0, %s136
      %s138 = sphi 0, %s136
      %s139 = sphi 0, %s138
      %s153 = sphi 0, %s139
    $region4: #{pointer_generator_forward.4} parent=1 // loop_header_branch
      %16 = sbr.rel (%p14) target = $region8
    $region5: #{pointer_generator_forward.4} parent=1 // loop_body
      %s18 = ssub.s32 %s13, 1
      %s19 = ssub.s32 %s13, 2
      %s20 = sadd.s32 %s13, 1
      %s21 = ssub.s32 %s13, %s20
      %p22 = scmp.eq.s32.totalorder %s21, 0
      %s24 = sadd.s32 %s23, 1
      %s25 = scalar_select %p22, %s23, %s24
      %p28 = pneg %p22
      %p29 = scmp.eq.s32.totalorder %s13, 6
      %p30 = por %p28, %p29
      %p31 = scmp.ne.s32.totalorder %s23, %s26
      %p32 = scmp.eq.s32.totalorder %s13, 0
      %p33 = por %p31, %p32
      %p34 = scmp.ne.s32.totalorder %s23, %s26
      %p35 = scmp.eq.s32.totalorder %s18, 6
      %p36 = por %p34, %p35
      %p37 = scmp.ne.s32.totalorder %s26, %s27
      %p38 = scmp.eq.s32.totalorder %s18, 0
      %p39 = por %p37, %p38
      %p40 = scmp.ne.s32.totalorder %s26, %s27
      %p41 = scmp.eq.s32.totalorder %s19, 6
      %p42 = por %p40, %p41
      %p44 = scmp.ne.s32.totalorder %s27, %s43
      %p45 = scmp.eq.s32.totalorder %s19, 0
      %p46 = por %p44, %p45
      %s48 = sadd.s32 %s47, 1
      %p51 = scmp.eq.s32.totalorder %s13, 6
      %p52 = scmp.ne.s32.totalorder %s47, %s49
      %p53 = scmp.eq.s32.totalorder %s13, 0
      %p54 = por %p52, %p53
      %p55 = scmp.ne.s32.totalorder %s47, %s49
      %p56 = scmp.eq.s32.totalorder %s18, 6
      %p57 = por %p55, %p56
      %p58 = scmp.ne.s32.totalorder %s49, %s50
      %p59 = scmp.eq.s32.totalorder %s18, 0
      %p60 = por %p58, %p59
      %p61 = scmp.ne.s32.totalorder %s49, %s50
      %p62 = scmp.eq.s32.totalorder %s19, 6
      %p63 = por %p61, %p62
      %p65 = scmp.ne.s32.totalorder %s50, %s64
      %p66 = scmp.eq.s32.totalorder %s19, 0
      %p67 = por %p65, %p66
      %s69 = sadd.s32 %s68, 1
      %p72 = scmp.eq.s32.totalorder %s13, 6
      %p73 = scmp.ne.s32.totalorder %s68, %s70
      %p74 = scmp.eq.s32.totalorder %s13, 0
      %p75 = por %p73, %p74
      %p76 = scmp.ne.s32.totalorder %s68, %s70
      %p77 = scmp.eq.s32.totalorder %s18, 6
      %p78 = por %p76, %p77
      %p79 = scmp.ne.s32.totalorder %s70, %s71
      %p80 = scmp.eq.s32.totalorder %s18, 0
      %p81 = por %p79, %p80
      %p82 = scmp.ne.s32.totalorder %s70, %s71
      %p83 = scmp.eq.s32.totalorder %s19, 6
      %p84 = por %p82, %p83
      %p86 = scmp.ne.s32.totalorder %s71, %s85
      %p87 = scmp.eq.s32.totalorder %s19, 0
      %p88 = por %p86, %p87
      %s90 = sadd.s32 %s89, 1
      %p93 = scmp.eq.s32.totalorder %s13, 6
      %p94 = scmp.ne.s32.totalorder %s89, %s91
      %p95 = scmp.eq.s32.totalorder %s13, 0
      %p96 = por %p94, %p95
      %p97 = scmp.ne.s32.totalorder %s89, %s91
      %p98 = scmp.eq.s32.totalorder %s18, 6
      %p99 = por %p97, %p98
      %p100 = scmp.ne.s32.totalorder %s91, %s92
      %p101 = scmp.eq.s32.totalorder %s18, 0
      %p102 = por %p100, %p101
      %p103 = scmp.ne.s32.totalorder %s91, %s92
      %p104 = scmp.eq.s32.totalorder %s19, 6
      %p105 = por %p103, %p104
      %p107 = scmp.ne.s32.totalorder %s92, %s106
      %p108 = scmp.eq.s32.totalorder %s19, 0
      %p109 = por %p107, %p108
      %s110 = ssub.s32 %s13, %s20
      %p111 = scmp.eq.s32.totalorder %s110, 0
      %s113 = sadd.s32 %s112, 1
      %s114 = scalar_select %p111, %s112, %s113
      %p117 = pneg %p111
      %p118 = scmp.eq.s32.totalorder %s13, 6
      %p119 = por %p117, %p118
      %p120 = scmp.ne.s32.totalorder %s112, %s115
      %p121 = scmp.eq.s32.totalorder %s13, 0
      %p122 = por %p120, %p121
      %p123 = scmp.ne.s32.totalorder %s112, %s115
      %p124 = scmp.eq.s32.totalorder %s18, 6
      %p125 = por %p123, %p124
      %p126 = scmp.ne.s32.totalorder %s115, %s116
      %p127 = scmp.eq.s32.totalorder %s18, 0
      %p128 = por %p126, %p127
      %p129 = scmp.ne.s32.totalorder %s115, %s116
      %p130 = scmp.eq.s32.totalorder %s19, 6
      %p131 = por %p129, %p130
      %p133 = scmp.ne.s32.totalorder %s116, %s132
      %p134 = scmp.eq.s32.totalorder %s19, 0
      %p135 = por %p133, %p134
      %s137 = sadd.s32 %s136, 1
      %p140 = scmp.eq.s32.totalorder %s13, 6
      %p141 = scmp.ne.s32.totalorder %s136, %s138
      %p142 = scmp.eq.s32.totalorder %s13, 0
      %p143 = por %p141, %p142
      %p144 = scmp.ne.s32.totalorder %s136, %s138
      %p145 = scmp.eq.s32.totalorder %s18, 6
      %p146 = por %p144, %p145
      %p147 = scmp.ne.s32.totalorder %s138, %s139
      %p148 = scmp.eq.s32.totalorder %s18, 0
      %p149 = por %p147, %p148
      %p150 = scmp.ne.s32.totalorder %s138, %s139
      %p151 = scmp.eq.s32.totalorder %s19, 6
      %p152 = por %p150, %p151
      %p154 = scmp.ne.s32.totalorder %s139, %s153
      %p155 = scmp.eq.s32.totalorder %s19, 0
      %p156 = por %p154, %p155
      %p157 = scmp.le.s32.totalorder 1, %s13
      %p158 = scmp.lt.s32.totalorder %s13, 8
      %p159 = pnand %p157, %p158
      %p160 = pneg %p159
      // Predicated region
      $region9: #{pointer_generator_forward.4} parent=5 // pred_check
        _
      $region10: #{pointer_generator_forward.4} parent=5 // pred_check_branch
        %162 = sbr.rel (%p159) target = $region12
      $region11: #{pointer_generator_forward.4} parent=5 // pred_region
        %s163 = ssub.s32 %s13, 1
        // Predicated region
        $region13: #{pointer_generator_forward.4} parent=11 // pred_check
          %p164 = pneg %p60
        $region14: #{pointer_generator_forward.4} parent=11 // pred_check_branch
          %166 = sbr.rel (%p164) target = $region16
        $region15: #{pointer_generator_forward.4} parent=11 // pred_region
          _
        $region16: #{pointer_generator_forward.4} parent=11 // pred_fallthru
          _
        // Predicated region
        $region17: #{pointer_generator_forward.4} parent=11 // pred_check
          %p167 = pneg %p81
        $region18: #{pointer_generator_forward.4} parent=11 // pred_check_branch
          %169 = sbr.rel (%p167) target = $region20
        $region19: #{pointer_generator_forward.4} parent=11 // pred_region
          _
        $region20: #{pointer_generator_forward.4} parent=11 // pred_fallthru
          _
        // Predicated region
        $region21: #{pointer_generator_forward.4} parent=11 // pred_check
          %p170 = pneg %p102
        $region22: #{pointer_generator_forward.4} parent=11 // pred_check_branch
          %172 = sbr.rel (%p170) target = $region24
        $region23: #{pointer_generator_forward.4} parent=11 // pred_region
          _
        $region24: #{pointer_generator_forward.4} parent=11 // pred_fallthru
          _
      $region12: #{pointer_generator_forward.4} parent=5 // pred_fallthru
        _
      %p173 = scmp.lt.s32.totalorder %s13, 7
      // Predicated region
      $region25: #{pointer_generator_forward.4} parent=5 // pred_check
        %p174 = pneg %p173
      $region26: #{pointer_generator_forward.4} parent=5 // pred_check_branch
        %176 = sbr.rel (%p174) target = $region28
      $region27: #{pointer_generator_forward.4} parent=5 // pred_region
        // Predicated region
        $region29: #{pointer_generator_forward.4} parent=27 // pred_check
          %p177 = pneg %p33
        $region30: #{pointer_generator_forward.4} parent=27 // pred_check_branch
          %179 = sbr.rel (%p177) target = $region32
        $region31: #{pointer_generator_forward.4} parent=27 // pred_region
          %p180 = scmp.lt.s32.totalorder %s13, 6
          %s181 = scalar_select %p180, %s13, 6
          %s182 = smul.addr %s181, 2
          %s183 = scalar_lea.vmem %s0, %s182
        $region32: #{pointer_generator_forward.4} parent=27 // pred_fallthru
          _
      $region28: #{pointer_generator_forward.4} parent=5 // pred_fallthru
        _
      %p184 = scmp.le.s32.totalorder 1, %s13
      %p185 = scmp.lt.s32.totalorder %s13, 8
      %p186 = pnand %p184, %p185
      %p187 = pneg %p186
      // Predicated region
      $region33: #{pointer_generator_forward.4} parent=5 // pred_check
        _
      $region34: #{pointer_generator_forward.4} parent=5 // pred_check_branch
        %189 = sbr.rel (%p186) target = $region36
      $region35: #{pointer_generator_forward.4} parent=5 // pred_region
        %s190 = ssub.s32 %s13, 1
        %p191 = scmp.lt.s32.totalorder %s18, 6
        %s192 = scalar_select %p191, %s18, 6
        %s193 = smul.addr %s192, 2
        %s194 = scalar_lea.vmem %s0, %s193
        %p195 = pneg %p39
        %p196 = pneg %p36
        %p197 = pneg %p60
        %p198 = pneg %p57
        %p199 = pneg %p81
        %p200 = pneg %p78
        %p201 = pneg %p102
        %p202 = pneg %p99
        %p203 = pneg %p128
        %p204 = pneg %p125
        %p205 = scmp.lt.s32.totalorder %s18, 6
        %s206 = scalar_select %p205, %s18, 6
        %s207 = smul.addr %s206, 2
        %s208 = scalar_lea.vmem %s4, %s207
        %p209 = pneg %p149
        %p210 = pneg %p146
        %p211 = scmp.lt.s32.totalorder %s18, 6
        %s212 = scalar_select %p211, %s18, 6
        %s213 = smul.addr %s212, 2
        %s214 = scalar_lea.vmem %s0, %s213
        %p215 = scmp.lt.s32.totalorder %s18, 6
        %s216 = scalar_select %p215, %s18, 6
        %s217 = smul.addr %s216, 2
        %s218 = scalar_lea.vmem %s4, %s217
        %p220 = scmp.eq.s32.totalorder %s18, 0
        // Predicated region
        $region37: #{pointer_generator_forward.4} parent=35 // pred_check
          %p221 = pneg %p220
        $region38: #{pointer_generator_forward.4} parent=35 // pred_check_branch
          %223 = sbr.rel (%p221) target = $region40
        $region39: #{pointer_generator_forward.4} parent=35 // pred_region
          %v224 = vld [vmem:[%s1] sm:$0x3]
          %225 = vst [vmem:[#allocation2] sm:$0x3] %v224
        $region40: #{pointer_generator_forward.4} parent=35 // pred_fallthru
          _
        %v226 = vld [vmem:[#allocation2] sm:$0x3]
        %v227 = vld [vmem:[%s214] sm:$0x3]
        %v228 = vpack.c.bf16 %v226, %v226
        %v229 = vld [vmem:[%s2] sm:$0xf]
        %v230 = vld [vmem:[%s2 + $0x4] sm:$0xf]
        %v231 = vld [vmem:[%s2 + $0x8] sm:$0xf]
        %v232 = vld [vmem:[%s2 + $0xc] sm:$0xf]
        %v233 = vld [vmem:[%s2 + $0x10] sm:$0xf]
        %v234 = vld [vmem:[%s2 + $0x14] sm:$0xf]
        %v235 = vld [vmem:[%s2 + $0x18] sm:$0xf]
        %v236 = vld [vmem:[%s2 + $0x1c] sm:$0xf]
        %v237 = vld [vmem:[%s2 + $0x20] sm:$0xf]
        %v238 = vld [vmem:[%s2 + $0x24] sm:$0xf]
        %v239 = vld [vmem:[%s2 + $0x28] sm:$0xf]
        %v240 = vld [vmem:[%s2 + $0x2c] sm:$0xf]
        %v241 = vld [vmem:[%s2 + $0x30] sm:$0xf]
        %v242 = vld [vmem:[%s2 + $0x34] sm:$0xf]
        %v243 = vld [vmem:[%s2 + $0x38] sm:$0xf]
        %v244 = vld [vmem:[%s2 + $0x3c] sm:$0xf]
        %v261 = vunpack.c.l.b16 %v229
        %v262 = vunpack.c.l.b16 %v230
        %v263 = vunpack.c.l.b16 %v231
        %v264 = vunpack.c.l.b16 %v232
        %v265 = vunpack.c.l.b16 %v233
        %v266 = vunpack.c.l.b16 %v234
        %v267 = vunpack.c.l.b16 %v235
        %v268 = vunpack.c.l.b16 %v236
        %v269 = vunpack.c.l.b16 %v237
        %v270 = vunpack.c.l.b16 %v238
        %v271 = vunpack.c.l.b16 %v239
        %v272 = vunpack.c.l.b16 %v240
        %v273 = vunpack.c.l.b16 %v241
        %v274 = vunpack.c.l.b16 %v242
        %v275 = vunpack.c.l.b16 %v243
        %v276 = vunpack.c.l.b16 %v244
        %v277 = vpack.c.b16 %v262, %v261
        %v278 = vpack.c.b16 %v264, %v263
        %v279 = vpack.c.b16 %v266, %v265
        %v280 = vpack.c.b16 %v268, %v267
        %v281 = vpack.c.b16 %v270, %v269
        %v282 = vpack.c.b16 %v272, %v271
        %v283 = vpack.c.b16 %v274, %v273
        %v284 = vpack.c.b16 %v276, %v275
        %293 = vmatprep.subr.bf16.mxu0 0
        %294 = vmatpush1.bf16.msra.mxu0 %v277
        %295 = vmatprep.subr.bf16.mxu0 0
        %296 = vmatpush1.bf16.msra.mxu0 %v278
        %297 = vmatprep.subr.bf16.mxu0 0
        %298 = vmatpush1.bf16.msra.mxu0 %v279
        %299 = vmatprep.subr.bf16.mxu0 0
        %300 = vmatpush1.bf16.msra.mxu0 %v280
        %301 = vmatprep.subr.bf16.mxu0 0
        %302 = vmatpush1.bf16.msra.mxu0 %v281
        %303 = vmatprep.subr.bf16.mxu0 0
        %304 = vmatpush1.bf16.msra.mxu0 %v282
        %305 = vmatprep.subr.bf16.mxu0 0
        %306 = vmatpush1.bf16.msra.mxu0 %v283
        %307 = vmatprep.subr.bf16.mxu0 0
        %308 = vmatpush1.bf16.msra.mxu0 %v284
        %309 = vmatprep.subr.bf16.mxu0 0
        %310 = vmatpush1.bf16.msra.mxu0 0
        %311 = vmatprep.subr.bf16.mxu0 0
        %312 = vmatpush1.bf16.msra.mxu0 0
        %313 = vmatprep.subr.bf16.mxu0 0
        %314 = vmatpush1.bf16.msra.mxu0 0
        %315 = vmatprep.subr.bf16.mxu0 0
        %316 = vmatpush1.bf16.msra.mxu0 0
        %317 = vmatprep.subr.bf16.mxu0 0
        %318 = vmatpush1.bf16.msra.mxu0 0
        %319 = vmatprep.subr.bf16.mxu0 0
        %320 = vmatpush1.bf16.msra.mxu0 0
        %321 = vmatprep.subr.bf16.mxu0 0
        %322 = vmatpush1.bf16.msra.mxu0 0
        %323 = vmatprep.subr.bf16.mxu0 0
        %324 = vmatpush1.bf16.msra.mxu0 0
        %325 = vmatprep.mubr.bf16.mxu0 0
        %326 = vmatmul.mubr.bf16.gmra.mrb[0].mxu0 %v228
        %v327 = vpop.f32.mrb[0].mxu0
        %v328 = vadd.f32 0.0, %v327
        %v329 = vpop.f32.mrb[0].mxu0
        %v330 = vpop.f32.mrb[0].mxu0
        %v331 = vpop.f32.mrb[0].mxu0
        %332 = vdwg.mxu0
        %v333 = vadd.f32 %v227, %v328
        %v334 = vld [vmem:[%s3] sm:$0x1]
        %v336 = vlaneseq
        %v337 = vshrl.u32 %v336, 7
        %v338 = vsub.s32 0, %v337
        %v339 = vrot.slane %v334, %v338
        %v341 = vadd.f32 %v333, %v339
        %v342 = vtanh.pop %v341
        %343 = vst [vmem:[#allocation2] sm:$0x3] %v342
        %344 = vst [vmem:[%s218] sm:$0x3] %v342
        %p345 = scmp.eq.s32.totalorder %s18, 6
        // Predicated region
        $region41: #{pointer_generator_forward.4} parent=35 // pred_check
          %p346 = pneg %p345
        $region42: #{pointer_generator_forward.4} parent=35 // pred_check_branch
          %348 = sbr.rel (%p346) target = $region44
        $region43: #{pointer_generator_forward.4} parent=35 // pred_region
          %349 = vst [vmem:[#allocation3] sm:$0x3] %v342
        $region44: #{pointer_generator_forward.4} parent=35 // pred_fallthru
          _
        %p350 = scmp.lt.s32.totalorder %s18, 6
        %s351 = scalar_select %p350, %s18, 6
        %s352 = smul.addr %s351, 2
        %s353 = scalar_lea.vmem %s4, %s352
        // Predicated region
        $region45: #{pointer_generator_forward.4} parent=35 // pred_check
          %p354 = pneg %p125
        $region46: #{pointer_generator_forward.4} parent=35 // pred_check_branch
          %356 = sbr.rel (%p354) target = $region48
        $region47: #{pointer_generator_forward.4} parent=35 // pred_region
          _
        $region48: #{pointer_generator_forward.4} parent=35 // pred_fallthru
          _
        // Predicated region
        $region49: #{pointer_generator_forward.4} parent=35 // pred_check
          %p357 = pneg %p146
        $region50: #{pointer_generator_forward.4} parent=35 // pred_check_branch
          %359 = sbr.rel (%p357) target = $region52
        $region51: #{pointer_generator_forward.4} parent=35 // pred_region
          %s361 = ssub.s32 32, 32
          %362 = vsyncadd [#allocation4], %s361
          %s364 = sshll.u32 [#allocation3], 4
          %s365 = int_to_ptr.vmem [resolvable:$true] %s364
          %367 = dma.vmem_to_hbm [thread:$0]  %s365, 32, %s5, [#allocation4]
        $region52: #{pointer_generator_forward.4} parent=35 // pred_fallthru
          _
        // Predicated region
        $region53: #{pointer_generator_forward.4} parent=35 // pred_check
          %p368 = pneg %p146
        $region54: #{pointer_generator_forward.4} parent=35 // pred_check_branch
          %370 = sbr.rel (%p368) target = $region56
        $region55: #{pointer_generator_forward.4} parent=35 // pred_region
          %371 = dma.done [#allocation4], 32
        $region56: #{pointer_generator_forward.4} parent=35 // pred_fallthru
          _
      $region36: #{pointer_generator_forward.4} parent=5 // pred_fallthru
        _
      %p372 = scmp.le.s32.totalorder 2, %s13
      // Predicated region
      $region57: #{pointer_generator_forward.4} parent=5 // pred_check
        %p373 = pneg %p372
      $region58: #{pointer_generator_forward.4} parent=5 // pred_check_branch
        %375 = sbr.rel (%p373) target = $region60
      $region59: #{pointer_generator_forward.4} parent=5 // pred_region
        %s376 = ssub.s32 %s13, 2
        // Predicated region
        $region61: #{pointer_generator_forward.4} parent=59 // pred_check
          %p377 = pneg %p131
        $region62: #{pointer_generator_forward.4} parent=59 // pred_check_branch
          %379 = sbr.rel (%p377) target = $region64
        $region63: #{pointer_generator_forward.4} parent=59 // pred_region
          %p380 = scmp.lt.s32.totalorder %s19, 6
          %s381 = scalar_select %p380, %s19, 6
          %s382 = smul.addr %s381, 2
          %s383 = scalar_lea.vmem %s4, %s382
        $region64: #{pointer_generator_forward.4} parent=59 // pred_fallthru
          _
      $region60: #{pointer_generator_forward.4} parent=5 // pred_fallthru
        _
    $region6: #{pointer_generator_forward.4} parent=1 // loop_footer
      %s17 = sadd.s32 1, %s13
    $region7: #{pointer_generator_forward.4} parent=1 // loop_footer_branch
      %12 = sbr.rel target = $region3
    $region8: #{pointer_generator_forward.4} parent=1 // loop_exit
      _
    %384 = vsyncpa [#allocation4], 1
    %s385 = scalar_lea.sflag [#allocation4], 1
    %386 = vsyncpa %s385, 1

// kernel: pointer_generator_forward.5
$region0: #{pointer_generator_forward.5}
  #allocation0 [shape = 'u32[]', space=smem, size = 0x4, offset = 0x4, fixed_abs, tag = 'smem constant byte address 0x4 - core index']
  #allocation1 [shape = 'u32[144,128]{1,0:T(1,128)}', space=vmem, size = 0x12000, scoped, tag = 'internal scratch']
  %s0 = inlined_call_operand.hbm [shape: f32[2,7,128], index: 0, kind: input, shape index: {}]
  %s1 = inlined_call_operand.hbm [shape: f32[2,16,128], index: 1, kind: input, shape index: {}]
  %s2 = inlined_call_operand.hbm [shape: f32[2,1,16], index: 2, kind: input, shape index: {}]
  %s3 = inlined_call_operand.hbm [shape: bf16[128,128], index: 3, kind: input, shape index: {}]
  %s4 = inlined_call_operand.hbm [shape: bf16[128,128], index: 4, kind: input, shape index: {}]
  %s5 = inlined_call_operand.hbm [shape: bf16[128,128], index: 5, kind: input, shape index: {}]
  %s6 = inlined_call_operand.hbm [shape: f32[2,7,128], index: 6, kind: output, shape index: {0}]
  %s7 = inlined_call_operand.hbm [shape: f32[2,7,16], index: 7, kind: output, shape index: {1}]
  %8 = xla_tuple %s6, %s7
  %s9 = sld [smem:[#allocation0]]
  $region66: #{pointer_generator_forward.5} parent=0
    _
  %s11 = ssub.s32 1, %s9
  %s12 = scalar_select 0, %s11, %s9
  $region1: #{pointer_generator_forward.5} parent=0
    #allocation2 [shape = 'u8[8192]{0}', space=vmem, size = 0x2000, scoped, tag = 'input window, operand 0, single buffered']
    #allocation3 [shape = 's32[1]{0}', space=sflag, size = 0x4, scoped, tag = 'scoped memory for pointer_generator_forward.5']
    #allocation4 [shape = 's32[1]{0}', space=sflag, size = 0x4, scoped, tag = 'scoped memory for pointer_generator_forward.5']
    #allocation5 [shape = 'u8[16384]{0}', space=vmem, size = 0x4000, scoped, tag = 'input window, operand 1, single buffered']
    #allocation6 [shape = 's32[1]{0}', space=sflag, size = 0x4, scoped, tag = 'scoped memory for pointer_generator_forward.5']
    #allocation7 [shape = 'u8[1024]{0}', space=vmem, size = 0x400, scoped, tag = 'input window, operand 2, single buffered']
    #allocation8 [shape = 'u8[32768]{0}', space=vmem, size = 0x8000, scoped, tag = 'input window, operand 3, single buffered']
    #allocation9 [shape = 's32[1]{0}', space=sflag, size = 0x4, scoped, tag = 'scoped memory for pointer_generator_forward.5']
    #allocation10 [shape = 'u8[32768]{0}', space=vmem, size = 0x8000, scoped, tag = 'input window, operand 4, single buffered']
    #allocation11 [shape = 'u8[32768]{0}', space=vmem, size = 0x8000, scoped, tag = 'input window, operand 5, single buffered']
    #allocation12 [shape = 's32[1]{0}', space=sflag, size = 0x4, scoped, tag = 'scoped memory for pointer_generator_forward.5']
    #allocation13 [shape = 'u8[8192]{0}', space=vmem, size = 0x2000, scoped, tag = 'output window, operand 0, single buffered']
    #allocation14 [shape = 'u8[8192]{0}', space=vmem, size = 0x2000, scoped, tag = 'output window, operand 1, single buffered']
    #allocation15 [shape = 's32[1]{0}', space=sflag, size = 0x4, scoped, tag = 'scoped memory for pointer_generator_forward.5']
    %13 = vsyncpa [#allocation3], 0
    %14 = vsyncpa [#allocation6], 0
    %15 = vsyncpa [#allocation9], 0
    %16 = vsyncpa [#allocation12], 0
    %17 = vsyncpa [#allocation4], 0
    %18 = vsyncpa [#allocation15], 0
    // Predicated region
    $region2: #{pointer_generator_forward.5} parent=1 // pred_check
      _
    $region3: #{pointer_generator_forward.5} parent=1 // pred_check_branch
      %20 = sbr.rel (0) target = $region5
    $region4: #{pointer_generator_forward.5} parent=1 // pred_region
      %s22 = ssub.s32 256, 256
      %23 = vsyncadd [#allocation3], %s22
      %s24 = sshll.u32 [#allocation2], 4
      %s25 = int_to_ptr.vmem [resolvable:$true] %s24
      %30 = dma.hbm_to_vmem [thread:$0]  %s0, 256, %s25, [#allocation3], 128, 128, 8
    $region5: #{pointer_generator_forward.5} parent=1 // pred_fallthru
      _
    // Predicated region
    $region6: #{pointer_generator_forward.5} parent=1 // pred_check
      _
    $region7: #{pointer_generator_forward.5} parent=1 // pred_check_branch
      %32 = sbr.rel (0) target = $region9
    $region8: #{pointer_generator_forward.5} parent=1 // pred_region
      %s34 = ssub.s32 512, 512
      %35 = vsyncadd [#allocation6], %s34
      %s36 = sshll.u32 [#allocation5], 4
      %s37 = int_to_ptr.vmem [resolvable:$true] %s36
      %42 = dma.hbm_to_vmem [thread:$0]  %s1, 512, %s37, [#allocation6], 128, 128, 8
    $region9: #{pointer_generator_forward.5} parent=1 // pred_fallthru
      _
    // Predicated region
    $region10: #{pointer_generator_forward.5} parent=1 // pred_check
      _
    $region11: #{pointer_generator_forward.5} parent=1 // pred_check_branch
      %44 = sbr.rel (0) target = $region13
    $region12: #{pointer_generator_forward.5} parent=1 // pred_region
      %s46 = ssub.s32 32, 32
      %47 = vsyncadd [#allocation6], %s46
      %s48 = sshll.u32 [#allocation7], 4
      %s49 = int_to_ptr.vmem [resolvable:$true] %s48
      %54 = dma.hbm_to_vmem [thread:$0]  %s2, 32, %s49, [#allocation6], 16, 16, 1
    $region13: #{pointer_generator_forward.5} parent=1 // pred_fallthru
      _
    // Predicated region
    $region14: #{pointer_generator_forward.5} parent=1 // pred_check
      _
    $region15: #{pointer_generator_forward.5} parent=1 // pred_check_branch
      %56 = sbr.rel (0) target = $region17
    $region16: #{pointer_generator_forward.5} parent=1 // pred_region
      %s58 = ssub.s32 1024, 1024
      %59 = vsyncadd [#allocation9], %s58
      %s60 = sshll.u32 [#allocation8], 4
      %s61 = int_to_ptr.vmem [resolvable:$true] %s60
      %66 = dma.hbm_to_vmem [thread:$0]  %s3, 1024, %s61, [#allocation9], 64, 64, 4
    $region17: #{pointer_generator_forward.5} parent=1 // pred_fallthru
      _
    // Predicated region
    $region18: #{pointer_generator_forward.5} parent=1 // pred_check
      _
    $region19: #{pointer_generator_forward.5} parent=1 // pred_check_branch
      %68 = sbr.rel (0) target = $region21
    $region20: #{pointer_generator_forward.5} parent=1 // pred_region
      %s70 = ssub.s32 1024, 1024
      %71 = vsyncadd [#allocation9], %s70
      %s72 = sshll.u32 [#allocation10], 4
      %s73 = int_to_ptr.vmem [resolvable:$true] %s72
      %78 = dma.hbm_to_vmem [thread:$0]  %s4, 1024, %s73, [#allocation9], 64, 64, 4
    $region21: #{pointer_generator_forward.5} parent=1 // pred_fallthru
      _
    // Predicated region
    $region22: #{pointer_generator_forward.5} parent=1 // pred_check
      _
    $region23: #{pointer_generator_forward.5} parent=1 // pred_check_branch
      %80 = sbr.rel (0) target = $region25
    $region24: #{pointer_generator_forward.5} parent=1 // pred_region
      %s82 = ssub.s32 1024, 1024
      %83 = vsyncadd [#allocation12], %s82
      %s84 = sshll.u32 [#allocation11], 4
      %s85 = int_to_ptr.vmem [resolvable:$true] %s84
      %90 = dma.hbm_to_vmem [thread:$0]  %s5, 1024, %s85, [#allocation12], 64, 64, 4
    $region25: #{pointer_generator_forward.5} parent=1 // pred_fallthru
      _
    // Predicated region
    $region26: #{pointer_generator_forward.5} parent=1 // pred_check
      _
    $region27: #{pointer_generator_forward.5} parent=1 // pred_check_branch
      %92 = sbr.rel (0) target = $region29
    $region28: #{pointer_generator_forward.5} parent=1 // pred_region
      %93 = dma.done [#allocation3], 256
    $region29: #{pointer_generator_forward.5} parent=1 // pred_fallthru
      _
    // Predicated region
    $region30: #{pointer_generator_forward.5} parent=1 // pred_check
      _
    $region31: #{pointer_generator_forward.5} parent=1 // pred_check_branch
      %95 = sbr.rel (0) target = $region33
    $region32: #{pointer_generator_forward.5} parent=1 // pred_region
      %96 = dma.done [#allocation6], 512
    $region33: #{pointer_generator_forward.5} parent=1 // pred_fallthru
      _
    // Predicated region
    $region34: #{pointer_generator_forward.5} parent=1 // pred_check
      _
    $region35: #{pointer_generator_forward.5} parent=1 // pred_check_branch
      %98 = sbr.rel (0) target = $region37
    $region36: #{pointer_generator_forward.5} parent=1 // pred_region
      %99 = dma.done [#allocation6], 32
    $region37: #{pointer_generator_forward.5} parent=1 // pred_fallthru
      _
    // Predicated region
    $region38: #{pointer_generator_forward.5} parent=1 // pred_check
      _
    $region39: #{pointer_generator_forward.5} parent=1 // pred_check_branch
      %101 = sbr.rel (0) target = $region41
    $region40: #{pointer_generator_forward.5} parent=1 // pred_region
      %102 = dma.done [#allocation9], 1024
    $region41: #{pointer_generator_forward.5} parent=1 // pred_fallthru
      _
    // Predicated region
    $region42: #{pointer_generator_forward.5} parent=1 // pred_check
      _
    $region43: #{pointer_generator_forward.5} parent=1 // pred_check_branch
      %104 = sbr.rel (0) target = $region45
    $region44: #{pointer_generator_forward.5} parent=1 // pred_region
      %105 = dma.done [#allocation9], 1024
    $region45: #{pointer_generator_forward.5} parent=1 // pred_fallthru
      _
    // Predicated region
    $region46: #{pointer_generator_forward.5} parent=1 // pred_check
      _
    $region47: #{pointer_generator_forward.5} parent=1 // pred_check_branch
      %107 = sbr.rel (0) target = $region49
    $region48: #{pointer_generator_forward.5} parent=1 // pred_region
      %108 = dma.done [#allocation12], 1024
    $region49: #{pointer_generator_forward.5} parent=1 // pred_fallthru
      _
    %v110 = vld [vmem:[#allocation2] sm:$0x7f]
    %v111 = vld [vmem:[#allocation2 + $0x8] sm:$0x7f]
    %v112 = vld [vmem:[#allocation5] sm:$0xff]
    %v113 = vld [vmem:[#allocation5 + $0x8] sm:$0xff]
    %v114 = vld [vmem:[#allocation5 + $0x10] sm:$0xff]
    %v115 = vld [vmem:[#allocation5 + $0x18] sm:$0xff]
    %v116 = vpack.c.bf16 %v110, %v110
    %v117 = vpack.c.bf16 %v111, %v111
    %v118 = vpack.c.bf16 %v113, %v112
    %v119 = vpack.c.bf16 %v115, %v114
    %v120 = vld [vmem:[#allocation8] sm:$0xf]
    %v121 = vld [vmem:[#allocation8 + $0x4] sm:$0xf]
    %v122 = vld [vmem:[#allocation8 + $0x8] sm:$0xf]
    %v123 = vld [vmem:[#allocation8 + $0xc] sm:$0xf]
    %v124 = vld [vmem:[#allocation8 + $0x10] sm:$0xf]
    %v125 = vld [vmem:[#allocation8 + $0x14] sm:$0xf]
    %v126 = vld [vmem:[#allocation8 + $0x18] sm:$0xf]
    %v127 = vld [vmem:[#allocation8 + $0x1c] sm:$0xf]
    %v128 = vld [vmem:[#allocation8 + $0x20] sm:$0xf]
    %v129 = vld [vmem:[#allocation8 + $0x24] sm:$0xf]
    %v130 = vld [vmem:[#allocation8 + $0x28] sm:$0xf]
    %v131 = vld [vmem:[#allocation8 + $0x2c] sm:$0xf]
    %v132 = vld [vmem:[#allocation8 + $0x30] sm:$0xf]
    %v133 = vld [vmem:[#allocation8 + $0x34] sm:$0xf]
    %v134 = vld [vmem:[#allocation8 + $0x38] sm:$0xf]
    %v135 = vld [vmem:[#allocation8 + $0x3c] sm:$0xf]
    %v136 = vld [vmem:[#allocation10] sm:$0xf]
    %v137 = vld [vmem:[#allocation10 + $0x4] sm:$0xf]
    %v138 = vld [vmem:[#allocation10 + $0x8] sm:$0xf]
    %v139 = vld [vmem:[#allocation10 + $0xc] sm:$0xf]
    %v140 = vld [vmem:[#allocation10 + $0x10] sm:$0xf]
    %v141 = vld [vmem:[#allocation10 + $0x14] sm:$0xf]
    %v142 = vld [vmem:[#allocation10 + $0x18] sm:$0xf]
    %v143 = vld [vmem:[#allocation10 + $0x1c] sm:$0xf]
    %v144 = vld [vmem:[#allocation10 + $0x20] sm:$0xf]
    %v145 = vld [vmem:[#allocation10 + $0x24] sm:$0xf]
    %v146 = vld [vmem:[#allocation10 + $0x28] sm:$0xf]
    %v147 = vld [vmem:[#allocation10 + $0x2c] sm:$0xf]
    %v148 = vld [vmem:[#allocation10 + $0x30] sm:$0xf]
    %v149 = vld [vmem:[#allocation10 + $0x34] sm:$0xf]
    %v150 = vld [vmem:[#allocation10 + $0x38] sm:$0xf]
    %v151 = vld [vmem:[#allocation10 + $0x3c] sm:$0xf]
    %v152 = vld [vmem:[#allocation11] sm:$0xf]
    %v153 = vld [vmem:[#allocation11 + $0x4] sm:$0xf]
    %v154 = vld [vmem:[#allocation11 + $0x8] sm:$0xf]
    %v155 = vld [vmem:[#allocation11 + $0xc] sm:$0xf]
    %v156 = vld [vmem:[#allocation11 + $0x10] sm:$0xf]
    %v157 = vld [vmem:[#allocation11 + $0x14] sm:$0xf]
    %v158 = vld [vmem:[#allocation11 + $0x18] sm:$0xf]
    %v159 = vld [vmem:[#allocation11 + $0x1c] sm:$0xf]
    %v160 = vld [vmem:[#allocation11 + $0x20] sm:$0xf]
    %v161 = vld [vmem:[#allocation11 + $0x24] sm:$0xf]
    %v162 = vld [vmem:[#allocation11 + $0x28] sm:$0xf]
    %v163 = vld [vmem:[#allocation11 + $0x2c] sm:$0xf]
    %v164 = vld [vmem:[#allocation11 + $0x30] sm:$0xf]
    %v165 = vld [vmem:[#allocation11 + $0x34] sm:$0xf]
    %v166 = vld [vmem:[#allocation11 + $0x38] sm:$0xf]
    %v167 = vld [vmem:[#allocation11 + $0x3c] sm:$0xf]
    %v184 = vunpack.c.l.b16 %v120
    %v185 = vunpack.c.l.b16 %v121
    %v186 = vunpack.c.l.b16 %v122
    %v187 = vunpack.c.l.b16 %v123
    %v188 = vunpack.c.l.b16 %v124
    %v189 = vunpack.c.l.b16 %v125
    %v190 = vunpack.c.l.b16 %v126
    %v191 = vunpack.c.l.b16 %v127
    %v192 = vunpack.c.l.b16 %v128
    %v193 = vunpack.c.l.b16 %v129
    %v194 = vunpack.c.l.b16 %v130
    %v195 = vunpack.c.l.b16 %v131
    %v196 = vunpack.c.l.b16 %v132
    %v197 = vunpack.c.l.b16 %v133
    %v198 = vunpack.c.l.b16 %v134
    %v199 = vunpack.c.l.b16 %v135
    %v200 = vpack.c.b16 %v185, %v184
    %v201 = vpack.c.b16 %v187, %v186
    %v202 = vpack.c.b16 %v189, %v188
    %v203 = vpack.c.b16 %v191, %v190
    %v204 = vpack.c.b16 %v193, %v192
    %v205 = vpack.c.b16 %v195, %v194
    %v206 = vpack.c.b16 %v197, %v196
    %v207 = vpack.c.b16 %v199, %v198
    %216 = vmatprep.subr.bf16.mxu0 0
    %217 = vmatpush1.bf16.msra.mxu0 %v200
    %218 = vmatprep.subr.bf16.mxu0 0
    %219 = vmatpush1.bf16.msra.mxu0 %v201
    %220 = vmatprep.subr.bf16.mxu0 0
    %221 = vmatpush1.bf16.msra.mxu0 %v202
    %222 = vmatprep.subr.bf16.mxu0 0
    %223 = vmatpush1.bf16.msra.mxu0 %v203
    %224 = vmatprep.subr.bf16.mxu0 0
    %225 = vmatpush1.bf16.msra.mxu0 %v204
    %226 = vmatprep.subr.bf16.mxu0 0
    %227 = vmatpush1.bf16.msra.mxu0 %v205
    %228 = vmatprep.subr.bf16.mxu0 0
    %229 = vmatpush1.bf16.msra.mxu0 %v206
    %230 = vmatprep.subr.bf16.mxu0 0
    %231 = vmatpush1.bf16.msra.mxu0 %v207
    %232 = vmatprep.subr.bf16.mxu0 0
    %233 = vmatpush1.bf16.msra.mxu0 0
    %234 = vmatprep.subr.bf16.mxu0 0
    %235 = vmatpush1.bf16.msra.mxu0 0
    %236 = vmatprep.subr.bf16.mxu0 0
    %237 = vmatpush1.bf16.msra.mxu0 0
    %238 = vmatprep.subr.bf16.mxu0 0
    %239 = vmatpush1.bf16.msra.mxu0 0
    %240 = vmatprep.subr.bf16.mxu0 0
    %241 = vmatpush1.bf16.msra.mxu0 0
    %242 = vmatprep.subr.bf16.mxu0 0
    %243 = vmatpush1.bf16.msra.mxu0 0
    %244 = vmatprep.subr.bf16.mxu0 0
    %245 = vmatpush1.bf16.msra.mxu0 0
    %246 = vmatprep.subr.bf16.mxu0 0
    %247 = vmatpush1.bf16.msra.mxu0 0
    %248 = vmatprep.mubr.bf16.mxu0 0
    %249 = vmatmul.mubr.bf16.gmra.mrb[0].mxu0 %v116
    %v250 = vpop.f32.mrb[0].mxu0
    %v251 = vadd.f32 0.0, %v250
    %v252 = vpop.f32.mrb[0].mxu0
    %v253 = vpop.f32.mrb[0].mxu0
    %v254 = vpop.f32.mrb[0].mxu0
    %255 = vdwg.mxu0
    %256 = vmatprep.subr.bf16.mxu0 0
    %257 = vmatpush1.bf16.msra.mxu0 %v200
    %258 = vmatprep.subr.bf16.mxu0 0
    %259 = vmatpush1.bf16.msra.mxu0 %v201
    %260 = vmatprep.subr.bf16.mxu0 0
    %261 = vmatpush1.bf16.msra.mxu0 %v202
    %262 = vmatprep.subr.bf16.mxu0 0
    %263 = vmatpush1.bf16.msra.mxu0 %v203
    %264 = vmatprep.subr.bf16.mxu0 0
    %265 = vmatpush1.bf16.msra.mxu0 %v204
    %266 = vmatprep.subr.bf16.mxu0 0
    %267 = vmatpush1.bf16.msra.mxu0 %v205
    %268 = vmatprep.subr.bf16.mxu0 0
    %269 = vmatpush1.bf16.msra.mxu0 %v206
    %270 = vmatprep.subr.bf16.mxu0 0
    %271 = vmatpush1.bf16.msra.mxu0 %v207
    %272 = vmatprep.subr.bf16.mxu0 0
    %273 = vmatpush1.bf16.msra.mxu0 0
    %274 = vmatprep.subr.bf16.mxu0 0
    %275 = vmatpush1.bf16.msra.mxu0 0
    %276 = vmatprep.subr.bf16.mxu0 0
    %277 = vmatpush1.bf16.msra.mxu0 0
    %278 = vmatprep.subr.bf16.mxu0 0
    %279 = vmatpush1.bf16.msra.mxu0 0
    %280 = vmatprep.subr.bf16.mxu0 0
    %281 = vmatpush1.bf16.msra.mxu0 0
    %282 = vmatprep.subr.bf16.mxu0 0
    %283 = vmatpush1.bf16.msra.mxu0 0
    %284 = vmatprep.subr.bf16.mxu0 0
    %285 = vmatpush1.bf16.msra.mxu0 0
    %286 = vmatprep.subr.bf16.mxu0 0
    %287 = vmatpush1.bf16.msra.mxu0 0
    %288 = vmatprep.mubr.bf16.mxu0 0
    %289 = vmatmul.mubr.bf16.gmra.mrb[0].mxu0 %v117
    %v290 = vpop.f32.mrb[0].mxu0
    %v291 = vadd.f32 0.0, %v290
    %v292 = vpop.f32.mrb[0].mxu0
    %v293 = vpop.f32.mrb[0].mxu0
    %v294 = vpop.f32.mrb[0].mxu0
    %295 = vdwg.mxu0
    %v296 = vpack.c.bf16 %v251, %v251
    %v297 = vpack.c.bf16 %v291, %v291
    %298 = vmatprep.subr.bf16.mxu0 0
    %299 = vmatpush1.bf16.xpose.msra.mxu0 %v118
    %300 = vmatprep.subr.bf16.mxu0 0
    %301 = vmatpush1.bf16.xpose.msra.mxu0 0
    %302 = vmatprep.subr.bf16.mxu0 0
    %303 = vmatpush1.bf16.xpose.msra.mxu0 0
    %304 = vmatprep.subr.bf16.mxu0 0
    %305 = vmatpush1.bf16.xpose.msra.mxu0 0
    %306 = vmatprep.subr.bf16.mxu0 0
    %307 = vmatpush1.bf16.xpose.msra.mxu0 0
    %308 = vmatprep.subr.bf16.mxu0 0
    %309 = vmatpush1.bf16.xpose.msra.mxu0 0
    %310 = vmatprep.subr.bf16.mxu0 0
    %311 = vmatpush1.bf16.xpose.msra.mxu0 0
    %312 = vmatprep.subr.bf16.mxu0 0
    %313 = vmatpush1.bf16.xpose.msra.mxu0 0
    %314 = vmatprep.subr.bf16.mxu0 0
    %315 = vmatpush1.bf16.xpose.msra.mxu0 0
    %316 = vmatprep.subr.bf16.mxu0 0
    %317 = vmatpush1.bf16.xpose.msra.mxu0 0
    %318 = vmatprep.subr.bf16.mxu0 0
    %319 = vmatpush1.bf16.xpose.msra.mxu0 0
    %320 = vmatprep.subr.bf16.mxu0 0
    %321 = vmatpush1.bf16.xpose.msra.mxu0 0
    %322 = vmatprep.subr.bf16.mxu0 0
    %323 = vmatpush1.bf16.xpose.msra.mxu0 0
    %324 = vmatprep.subr.bf16.mxu0 0
    %325 = vmatpush1.bf16.xpose.msra.mxu0 0
    %326 = vmatprep.subr.bf16.mxu0 0
    %327 = vmatpush1.bf16.xpose.msra.mxu0 0
    %328 = vmatprep.subr.bf16.mxu0 0
    %329 = vmatpush1.bf16.xpose.msra.mxu0 0
    %330 = vmatprep.mubr.bf16.mxu0 0
    %331 = vmatmul.mubr.bf16.gmra.mrb[0].mxu0 %v296
    %v332 = vpop.f32.mrb[0].mxu0
    %v333 = vadd.f32 0.0, %v332
    %v334 = vpop.f32.mrb[0].mxu0
    %v335 = vpop.f32.mrb[0].mxu0
    %v336 = vpop.f32.mrb[0].mxu0
    %337 = vdwg.mxu0
    %338 = vmatprep.subr.bf16.mxu0 0
    %339 = vmatpush1.bf16.xpose.msra.mxu0 %v119
    %340 = vmatprep.subr.bf16.mxu0 0
    %341 = vmatpush1.bf16.xpose.msra.mxu0 0
    %342 = vmatprep.subr.bf16.mxu0 0
    %343 = vmatpush1.bf16.xpose.msra.mxu0 0
    %344 = vmatprep.subr.bf16.mxu0 0
    %345 = vmatpush1.bf16.xpose.msra.mxu0 0
    %346 = vmatprep.subr.bf16.mxu0 0
    %347 = vmatpush1.bf16.xpose.msra.mxu0 0
    %348 = vmatprep.subr.bf16.mxu0 0
    %349 = vmatpush1.bf16.xpose.msra.mxu0 0
    %350 = vmatprep.subr.bf16.mxu0 0
    %351 = vmatpush1.bf16.xpose.msra.mxu0 0
    %352 = vmatprep.subr.bf16.mxu0 0
    %353 = vmatpush1.bf16.xpose.msra.mxu0 0
    %354 = vmatprep.subr.bf16.mxu0 0
    %355 = vmatpush1.bf16.xpose.msra.mxu0 0
    %356 = vmatprep.subr.bf16.mxu0 0
    %357 = vmatpush1.bf16.xpose.msra.mxu0 0
    %358 = vmatprep.subr.bf16.mxu0 0
    %359 = vmatpush1.bf16.xpose.msra.mxu0 0
    %360 = vmatprep.subr.bf16.mxu0 0
    %361 = vmatpush1.bf16.xpose.msra.mxu0 0
    %362 = vmatprep.subr.bf16.mxu0 0
    %363 = vmatpush1.bf16.xpose.msra.mxu0 0
    %364 = vmatprep.subr.bf16.mxu0 0
    %365 = vmatpush1.bf16.xpose.msra.mxu0 0
    %366 = vmatprep.subr.bf16.mxu0 0
    %367 = vmatpush1.bf16.xpose.msra.mxu0 0
    %368 = vmatprep.subr.bf16.mxu0 0
    %369 = vmatpush1.bf16.xpose.msra.mxu0 0
    %370 = vmatprep.mubr.bf16.mxu0 0
    %371 = vmatmul.mubr.bf16.gmra.mrb[0].mxu0 %v297
    %v372 = vpop.f32.mrb[0].mxu0
    %v373 = vadd.f32 0.0, %v372
    %v374 = vpop.f32.mrb[0].mxu0
    %v375 = vpop.f32.mrb[0].mxu0
    %v376 = vpop.f32.mrb[0].mxu0
    %377 = vdwg.mxu0
    %v378 = vld [vmem:[#allocation7] sm:$0x1]
    %v379 = vld [vmem:[#allocation7 + $0x1] sm:$0x1]
    %vm380 = vcmp.gt.f32.partialorder %v378, 0.0
    %vm381 = vcmp.gt.f32.partialorder %v379, 0.0
    %v382 = vsel %vm380, 1, 0
    %v383 = vsel %vm381, 1, 0
    %v384 = vlaneseq
    %v385 = vshrl.u32 %v384, 7
    %v386 = vsub.s32 0, %v385
    %v387 = vrot.slane %v382, %v386
    %v388 = vlaneseq
    %v389 = vshrl.u32 %v388, 7
    %v390 = vsub.s32 0, %v389
    %v391 = vrot.slane %v383, %v390
    %vm392 = vcmp.eq.s32.totalorder %v387, 1
    %vm393 = vcmp.eq.s32.totalorder %v391, 1
    %v394 = vsel %vm392, %v333, -1e+09
    %v395 = vsel %vm393, %v373, -1e+09
    %vm396 = vcmask 129024
    %v397 = vsel %vm396, %v394, -inf
    %398 = vmax.xlane.f32.xlu0 %v397
    %v399 = vpop.xlane.xlu0 %398
    %v400 = vsel %vm396, %v395, -inf
    %401 = vmax.xlane.f32.xlu0 %v400
    %v402 = vpop.xlane.xlu0 %401
    %v403 = vsub.f32 %v394, %v399
    %v404 = vsub.f32 %v395, %v402
    %v405 = vmul.f32 %v403, 1.442695
    %v406 = vpow.pop %v405
    %v407 = vmul.f32 %v404, 1.442695
    %v408 = vpow.pop %v407
    %v409 = vsel %vm396, %v406, 0.0
    %410 = vadd.xlane.f32.xlu0 %v409
    %v411 = vpop.xlane.xlu0 %410
    %v412 = vsel %vm396, %v408, 0.0
    %413 = vadd.xlane.f32.xlu0 %v412
    %v414 = vpop.xlane.xlu0 %413
    %v415 = vmax.f32 %v411, 1e-30
    %v416 = vmax.f32 %v414, 1e-30
    %v417 = vrcp.pop %v415
    %v418 = vrcp.pop %v416
    %v419 = vmul.f32 %v406, %v417
    %v420 = vmul.f32 %v408, %v418
    %v421 = vpack.c.bf16 %v419, %v419
    %v422 = vpack.c.bf16 %v420, %v420
    %vm423 = vcmask 130048
    %v425 = vsel %vm423, %v421, 0
    %427 = vmatprep.subr.bf16.mxu0 0
    %428 = vmatpush1.bf16.msra.mxu0 %v118
    %429 = vmatprep.subr.bf16.mxu0 0
    %430 = vmatpush1.bf16.msra.mxu0 0
    %431 = vmatprep.subr.bf16.mxu0 0
    %432 = vmatpush1.bf16.msra.mxu0 0
    %433 = vmatprep.subr.bf16.mxu0 0
    %434 = vmatpush1.bf16.msra.mxu0 0
    %435 = vmatprep.subr.bf16.mxu0 0
    %436 = vmatpush1.bf16.msra.mxu0 0
    %437 = vmatprep.subr.bf16.mxu0 0
    %438 = vmatpush1.bf16.msra.mxu0 0
    %439 = vmatprep.subr.bf16.mxu0 0
    %440 = vmatpush1.bf16.msra.mxu0 0
    %441 = vmatprep.subr.bf16.mxu0 0
    %442 = vmatpush1.bf16.msra.mxu0 0
    %443 = vmatprep.subr.bf16.mxu0 0
    %444 = vmatpush1.bf16.msra.mxu0 0
    %445 = vmatprep.subr.bf16.mxu0 0
    %446 = vmatpush1.bf16.msra.mxu0 0
    %447 = vmatprep.subr.bf16.mxu0 0
    %448 = vmatpush1.bf16.msra.mxu0 0
    %449 = vmatprep.subr.bf16.mxu0 0
    %450 = vmatpush1.bf16.msra.mxu0 0
    %451 = vmatprep.subr.bf16.mxu0 0
    %452 = vmatpush1.bf16.msra.mxu0 0
    %453 = vmatprep.subr.bf16.mxu0 0
    %454 = vmatpush1.bf16.msra.mxu0 0
    %455 = vmatprep.subr.bf16.mxu0 0
    %456 = vmatpush1.bf16.msra.mxu0 0
    %457 = vmatprep.subr.bf16.mxu0 0
    %458 = vmatpush1.bf16.msra.mxu0 0
    %459 = vmatprep.mubr.bf16.mxu0 0
    %460 = vmatmul.mubr.bf16.gmra.mrb[0].mxu0 %v425
    %v461 = vpop.f32.mrb[0].mxu0
    %v462 = vadd.f32 0.0, %v461
    %v463 = vpop.f32.mrb[0].mxu0
    %v464 = vpop.f32.mrb[0].mxu0
    %v465 = vpop.f32.mrb[0].mxu0
    %466 = vdwg.mxu0
    %v468 = vsel %vm423, %v422, 0
    %470 = vmatprep.subr.bf16.mxu0 0
    %471 = vmatpush1.bf16.msra.mxu0 %v119
    %472 = vmatprep.subr.bf16.mxu0 0
    %473 = vmatpush1.bf16.msra.mxu0 0
    %474 = vmatprep.subr.bf16.mxu0 0
    %475 = vmatpush1.bf16.msra.mxu0 0
    %476 = vmatprep.subr.bf16.mxu0 0
    %477 = vmatpush1.bf16.msra.mxu0 0
    %478 = vmatprep.subr.bf16.mxu0 0
    %479 = vmatpush1.bf16.msra.mxu0 0
    %480 = vmatprep.subr.bf16.mxu0 0
    %481 = vmatpush1.bf16.msra.mxu0 0
    %482 = vmatprep.subr.bf16.mxu0 0
    %483 = vmatpush1.bf16.msra.mxu0 0
    %484 = vmatprep.subr.bf16.mxu0 0
    %485 = vmatpush1.bf16.msra.mxu0 0
    %486 = vmatprep.subr.bf16.mxu0 0
    %487 = vmatpush1.bf16.msra.mxu0 0
    %488 = vmatprep.subr.bf16.mxu0 0
    %489 = vmatpush1.bf16.msra.mxu0 0
    %490 = vmatprep.subr.bf16.mxu0 0
    %491 = vmatpush1.bf16.msra.mxu0 0
    %492 = vmatprep.subr.bf16.mxu0 0
    %493 = vmatpush1.bf16.msra.mxu0 0
    %494 = vmatprep.subr.bf16.mxu0 0
    %495 = vmatpush1.bf16.msra.mxu0 0
    %496 = vmatprep.subr.bf16.mxu0 0
    %497 = vmatpush1.bf16.msra.mxu0 0
    %498 = vmatprep.subr.bf16.mxu0 0
    %499 = vmatpush1.bf16.msra.mxu0 0
    %500 = vmatprep.subr.bf16.mxu0 0
    %501 = vmatpush1.bf16.msra.mxu0 0
    %502 = vmatprep.mubr.bf16.mxu0 0
    %503 = vmatmul.mubr.bf16.gmra.mrb[0].mxu0 %v468
    %v504 = vpop.f32.mrb[0].mxu0
    %v505 = vadd.f32 0.0, %v504
    %v506 = vpop.f32.mrb[0].mxu0
    %v507 = vpop.f32.mrb[0].mxu0
    %v508 = vpop.f32.mrb[0].mxu0
    %509 = vdwg.mxu0
    %v510 = vpack.c.bf16 %v462, %v462
    %v511 = vpack.c.bf16 %v505, %v505
    %v528 = vunpack.c.l.b16 %v152
    %v529 = vunpack.c.l.b16 %v153
    %v530 = vunpack.c.l.b16 %v154
    %v531 = vunpack.c.l.b16 %v155
    %v532 = vunpack.c.l.b16 %v156
    %v533 = vunpack.c.l.b16 %v157
    %v534 = vunpack.c.l.b16 %v158
    %v535 = vunpack.c.l.b16 %v159
    %v536 = vunpack.c.l.b16 %v160
    %v537 = vunpack.c.l.b16 %v161
    %v538 = vunpack.c.l.b16 %v162
    %v539 = vunpack.c.l.b16 %v163
    %v540 = vunpack.c.l.b16 %v164
    %v541 = vunpack.c.l.b16 %v165
    %v542 = vunpack.c.l.b16 %v166
    %v543 = vunpack.c.l.b16 %v167
    %v544 = vpack.c.b16 %v529, %v528
    %v545 = vpack.c.b16 %v531, %v530
    %v546 = vpack.c.b16 %v533, %v532
    %v547 = vpack.c.b16 %v535, %v534
    %v548 = vpack.c.b16 %v537, %v536
    %v549 = vpack.c.b16 %v539, %v538
    %v550 = vpack.c.b16 %v541, %v540
    %v551 = vpack.c.b16 %v543, %v542
    %560 = vmatprep.subr.bf16.mxu0 0
    %561 = vmatpush1.bf16.msra.mxu0 %v544
    %562 = vmatprep.subr.bf16.mxu0 0
    %563 = vmatpush1.bf16.msra.mxu0 %v545
    %564 = vmatprep.subr.bf16.mxu0 0
    %565 = vmatpush1.bf16.msra.mxu0 %v546
    %566 = vmatprep.subr.bf16.mxu0 0
    %567 = vmatpush1.bf16.msra.mxu0 %v547
    %568 = vmatprep.subr.bf16.mxu0 0
    %569 = vmatpush1.bf16.msra.mxu0 %v548
    %570 = vmatprep.subr.bf16.mxu0 0
    %571 = vmatpush1.bf16.msra.mxu0 %v549
    %572 = vmatprep.subr.bf16.mxu0 0
    %573 = vmatpush1.bf16.msra.mxu0 %v550
    %574 = vmatprep.subr.bf16.mxu0 0
    %575 = vmatpush1.bf16.msra.mxu0 %v551
    %576 = vmatprep.subr.bf16.mxu0 0
    %577 = vmatpush1.bf16.msra.mxu0 0
    %578 = vmatprep.subr.bf16.mxu0 0
    %579 = vmatpush1.bf16.msra.mxu0 0
    %580 = vmatprep.subr.bf16.mxu0 0
    %581 = vmatpush1.bf16.msra.mxu0 0
    %582 = vmatprep.subr.bf16.mxu0 0
    %583 = vmatpush1.bf16.msra.mxu0 0
    %584 = vmatprep.subr.bf16.mxu0 0
    %585 = vmatpush1.bf16.msra.mxu0 0
    %586 = vmatprep.subr.bf16.mxu0 0
    %587 = vmatpush1.bf16.msra.mxu0 0
    %588 = vmatprep.subr.bf16.mxu0 0
    %589 = vmatpush1.bf16.msra.mxu0 0
    %590 = vmatprep.subr.bf16.mxu0 0
    %591 = vmatpush1.bf16.msra.mxu0 0
    %592 = vmatprep.mubr.bf16.mxu0 0
    %593 = vmatmul.mubr.bf16.gmra.mrb[0].mxu0 %v116
    %v594 = vpop.f32.mrb[0].mxu0
    %v595 = vadd.f32 0.0, %v594
    %v596 = vpop.f32.mrb[0].mxu0
    %v597 = vpop.f32.mrb[0].mxu0
    %v598 = vpop.f32.mrb[0].mxu0
    %599 = vdwg.mxu0
    %600 = vmatprep.subr.bf16.mxu0 0
    %601 = vmatpush1.bf16.msra.mxu0 %v544
    %602 = vmatprep.subr.bf16.mxu0 0
    %603 = vmatpush1.bf16.msra.mxu0 %v545
    %604 = vmatprep.subr.bf16.mxu0 0
    %605 = vmatpush1.bf16.msra.mxu0 %v546
    %606 = vmatprep.subr.bf16.mxu0 0
    %607 = vmatpush1.bf16.msra.mxu0 %v547
    %608 = vmatprep.subr.bf16.mxu0 0
    %609 = vmatpush1.bf16.msra.mxu0 %v548
    %610 = vmatprep.subr.bf16.mxu0 0
    %611 = vmatpush1.bf16.msra.mxu0 %v549
    %612 = vmatprep.subr.bf16.mxu0 0
    %613 = vmatpush1.bf16.msra.mxu0 %v550
    %614 = vmatprep.subr.bf16.mxu0 0
    %615 = vmatpush1.bf16.msra.mxu0 %v551
    %616 = vmatprep.subr.bf16.mxu0 0
    %617 = vmatpush1.bf16.msra.mxu0 0
    %618 = vmatprep.subr.bf16.mxu0 0
    %619 = vmatpush1.bf16.msra.mxu0 0
    %620 = vmatprep.subr.bf16.mxu0 0
    %621 = vmatpush1.bf16.msra.mxu0 0
    %622 = vmatprep.subr.bf16.mxu0 0
    %623 = vmatpush1.bf16.msra.mxu0 0
    %624 = vmatprep.subr.bf16.mxu0 0
    %625 = vmatpush1.bf16.msra.mxu0 0
    %626 = vmatprep.subr.bf16.mxu0 0
    %627 = vmatpush1.bf16.msra.mxu0 0
    %628 = vmatprep.subr.bf16.mxu0 0
    %629 = vmatpush1.bf16.msra.mxu0 0
    %630 = vmatprep.subr.bf16.mxu0 0
    %631 = vmatpush1.bf16.msra.mxu0 0
    %632 = vmatprep.mubr.bf16.mxu0 0
    %633 = vmatmul.mubr.bf16.gmra.mrb[0].mxu0 %v117
    %v634 = vpop.f32.mrb[0].mxu0
    %v635 = vadd.f32 0.0, %v634
    %v636 = vpop.f32.mrb[0].mxu0
    %v637 = vpop.f32.mrb[0].mxu0
    %v638 = vpop.f32.mrb[0].mxu0
    %639 = vdwg.mxu0
    %v656 = vunpack.c.l.b16 %v136
    %v657 = vunpack.c.l.b16 %v137
    %v658 = vunpack.c.l.b16 %v138
    %v659 = vunpack.c.l.b16 %v139
    %v660 = vunpack.c.l.b16 %v140
    %v661 = vunpack.c.l.b16 %v141
    %v662 = vunpack.c.l.b16 %v142
    %v663 = vunpack.c.l.b16 %v143
    %v664 = vunpack.c.l.b16 %v144
    %v665 = vunpack.c.l.b16 %v145
    %v666 = vunpack.c.l.b16 %v146
    %v667 = vunpack.c.l.b16 %v147
    %v668 = vunpack.c.l.b16 %v148
    %v669 = vunpack.c.l.b16 %v149
    %v670 = vunpack.c.l.b16 %v150
    %v671 = vunpack.c.l.b16 %v151
    %v672 = vpack.c.b16 %v657, %v656
    %v673 = vpack.c.b16 %v659, %v658
    %v674 = vpack.c.b16 %v661, %v660
    %v675 = vpack.c.b16 %v663, %v662
    %v676 = vpack.c.b16 %v665, %v664
    %v677 = vpack.c.b16 %v667, %v666
    %v678 = vpack.c.b16 %v669, %v668
    %v679 = vpack.c.b16 %v671, %v670
    %688 = vmatprep.subr.bf16.mxu0 0
    %689 = vmatpush1.bf16.msra.mxu0 %v672
    %690 = vmatprep.subr.bf16.mxu0 0
    %691 = vmatpush1.bf16.msra.mxu0 %v673
    %692 = vmatprep.subr.bf16.mxu0 0
    %693 = vmatpush1.bf16.msra.mxu0 %v674
    %694 = vmatprep.subr.bf16.mxu0 0
    %695 = vmatpush1.bf16.msra.mxu0 %v675
    %696 = vmatprep.subr.bf16.mxu0 0
    %697 = vmatpush1.bf16.msra.mxu0 %v676
    %698 = vmatprep.subr.bf16.mxu0 0
    %699 = vmatpush1.bf16.msra.mxu0 %v677
    %700 = vmatprep.subr.bf16.mxu0 0
    %701 = vmatpush1.bf16.msra.mxu0 %v678
    %702 = vmatprep.subr.bf16.mxu0 0
    %703 = vmatpush1.bf16.msra.mxu0 %v679
    %704 = vmatprep.subr.bf16.mxu0 0
    %705 = vmatpush1.bf16.msra.mxu0 0
    %706 = vmatprep.subr.bf16.mxu0 0
    %707 = vmatpush1.bf16.msra.mxu0 0
    %708 = vmatprep.subr.bf16.mxu0 0
    %709 = vmatpush1.bf16.msra.mxu0 0
    %710 = vmatprep.subr.bf16.mxu0 0
    %711 = vmatpush1.bf16.msra.mxu0 0
    %712 = vmatprep.subr.bf16.mxu0 0
    %713 = vmatpush1.bf16.msra.mxu0 0
    %714 = vmatprep.subr.bf16.mxu0 0
    %715 = vmatpush1.bf16.msra.mxu0 0
    %716 = vmatprep.subr.bf16.mxu0 0
    %717 = vmatpush1.bf16.msra.mxu0 0
    %718 = vmatprep.subr.bf16.mxu0 0
    %719 = vmatpush1.bf16.msra.mxu0 0
    %720 = vmatprep.mubr.bf16.mxu0 0
    %721 = vmatmul.mubr.bf16.gmra.mrb[0].mxu0 %v510
    %v722 = vpop.f32.mrb[0].mxu0
    %v723 = vadd.f32 %v595, %v722
    %v724 = vpop.f32.mrb[0].mxu0
    %v725 = vpop.f32.mrb[0].mxu0
    %v726 = vpop.f32.mrb[0].mxu0
    %727 = vdwg.mxu0
    %728 = vmatprep.subr.bf16.mxu0 0
    %729 = vmatpush1.bf16.msra.mxu0 %v672
    %730 = vmatprep.subr.bf16.mxu0 0
    %731 = vmatpush1.bf16.msra.mxu0 %v673
    %732 = vmatprep.subr.bf16.mxu0 0
    %733 = vmatpush1.bf16.msra.mxu0 %v674
    %734 = vmatprep.subr.bf16.mxu0 0
    %735 = vmatpush1.bf16.msra.mxu0 %v675
    %736 = vmatprep.subr.bf16.mxu0 0
    %737 = vmatpush1.bf16.msra.mxu0 %v676
    %738 = vmatprep.subr.bf16.mxu0 0
    %739 = vmatpush1.bf16.msra.mxu0 %v677
    %740 = vmatprep.subr.bf16.mxu0 0
    %741 = vmatpush1.bf16.msra.mxu0 %v678
    %742 = vmatprep.subr.bf16.mxu0 0
    %743 = vmatpush1.bf16.msra.mxu0 %v679
    %744 = vmatprep.subr.bf16.mxu0 0
    %745 = vmatpush1.bf16.msra.mxu0 0
    %746 = vmatprep.subr.bf16.mxu0 0
    %747 = vmatpush1.bf16.msra.mxu0 0
    %748 = vmatprep.subr.bf16.mxu0 0
    %749 = vmatpush1.bf16.msra.mxu0 0
    %750 = vmatprep.subr.bf16.mxu0 0
    %751 = vmatpush1.bf16.msra.mxu0 0
    %752 = vmatprep.subr.bf16.mxu0 0
    %753 = vmatpush1.bf16.msra.mxu0 0
    %754 = vmatprep.subr.bf16.mxu0 0
    %755 = vmatpush1.bf16.msra.mxu0 0
    %756 = vmatprep.subr.bf16.mxu0 0
    %757 = vmatpush1.bf16.msra.mxu0 0
    %758 = vmatprep.subr.bf16.mxu0 0
    %759 = vmatpush1.bf16.msra.mxu0 0
    %760 = vmatprep.mubr.bf16.mxu0 0
    %761 = vmatmul.mubr.bf16.gmra.mrb[0].mxu0 %v511
    %v762 = vpop.f32.mrb[0].mxu0
    %v763 = vadd.f32 %v635, %v762
    %v764 = vpop.f32.mrb[0].mxu0
    %v765 = vpop.f32.mrb[0].mxu0
    %v766 = vpop.f32.mrb[0].mxu0
    %767 = vdwg.mxu0
    %v768 = vtanh.pop %v723
    %v769 = vtanh.pop %v763
    %770 = vst [vmem:[#allocation13] sm:$0x7f] %v768
    %771 = vst [vmem:[#allocation13 + $0x8] sm:$0x7f] %v769
    %772 = vst.msk [vmem:[#allocation14] sm:$0x7f] %vm396, %v419
    %773 = vst.msk [vmem:[#allocation14 + $0x8] sm:$0x7f] %vm396, %v420
    // Predicated region
    $region50: #{pointer_generator_forward.5} parent=1 // pred_check
      _
    $region51: #{pointer_generator_forward.5} parent=1 // pred_check_branch
      %775 = sbr.rel (0) target = $region53
    $region52: #{pointer_generator_forward.5} parent=1 // pred_region
      %s777 = ssub.s32 256, 256
      %778 = vsyncadd [#allocation4], %s777
      %s779 = sshll.u32 [#allocation13], 4
      %s780 = int_to_ptr.vmem [resolvable:$true] %s779
      %785 = dma.vmem_to_hbm [thread:$0]  %s780, 256, %s6, [#allocation4], 128, 128, 8
    $region53: #{pointer_generator_forward.5} parent=1 // pred_fallthru
      _
    // Predicated region
    $region54: #{pointer_generator_forward.5} parent=1 // pred_check
      _
    $region55: #{pointer_generator_forward.5} parent=1 // pred_check_branch
      %787 = sbr.rel (0) target = $region57
    $region56: #{pointer_generator_forward.5} parent=1 // pred_region
      %s789 = ssub.s32 256, 256
      %790 = vsyncadd [#allocation15], %s789
      %s791 = sshll.u32 [#allocation14], 4
      %s792 = int_to_ptr.vmem [resolvable:$true] %s791
      %797 = dma.vmem_to_hbm [thread:$0]  %s792, 256, %s7, [#allocation15], 128, 128, 8
    $region57: #{pointer_generator_forward.5} parent=1 // pred_fallthru
      _
    // Predicated region
    $region58: #{pointer_generator_forward.5} parent=1 // pred_check
      _
    $region59: #{pointer_generator_forward.5} parent=1 // pred_check_branch
      %799 = sbr.rel (0) target = $region61
    $region60: #{pointer_generator_forward.5} parent=1 // pred_region
      %800 = dma.done [#allocation4], 256
    $region61: #{pointer_generator_forward.5} parent=1 // pred_fallthru
      _
    // Predicated region
    $region62: #{pointer_generator_forward.5} parent=1 // pred_check
      _
    $region63: #{pointer_generator_forward.5} parent=1 // pred_check_branch
      %802 = sbr.rel (0) target = $region65
    $region64: #{pointer_generator_forward.5} parent=1 // pred_region
      %803 = dma.done [#allocation15], 256
    $region65: #{pointer_generator_forward.5} parent=1 // pred_fallthru
      _
    %804 = vsyncpa [#allocation3], 1
    %805 = vsyncpa [#allocation6], 1
    %806 = vsyncpa [#allocation9], 1
    %807 = vsyncpa [#allocation12], 1
    %808 = vsyncpa [#allocation4], 1
    %809 = vsyncpa [#allocation15], 1

</llo_original>
